<compile_context>
chip_gen: v7x
topology: tpu7x:2x2x1
jax: 0.10.0
libtpu: 0.0.40
codegen_flags: <defaults>
</compile_context>

<pallas_src>
import jax
import jax.numpy as jnp
import numpy as np
from jax import lax
from jax.experimental import pallas as pl
from jax.experimental.pallas import tpu as pltpu


# ----------------------------------------------------------------------------
# Fused per-batch kernel:
#   qkv  = x @ (Wqkv^T with scale folded into q columns)   -> VMEM scratch (compute dtype)
#   per head h: s = q_h k_h^T ; p = softmax(s) ; o_h = p v_h ; acc += o_h @ Wproj^T[h]
#   y    = acc + bias                                       (single lane-dense (N,C) store)
# ----------------------------------------------------------------------------
def _make_attn_kernel(num_heads, head_dim, compute_dtype, with_attn):
    C = num_heads * head_dim

    def body(x_ref, wqkv_ref, wproj_ref, bias_ref, y_ref, attn_ref, qkv_ref, acc_ref):
        x = x_ref[0]                                              # (N, C) compute dtype

        # One wide (N,C)x(C,3C) MXU matmul; weights are VMEM-resident (constant index_map).
        qkv = jnp.dot(x, wqkv_ref[...], preferred_element_type=jnp.float32)

        # Park QKV in VMEM scratch (compute dtype): frees vregs for the matmul pipeline and,
        # on the bf16 path, feeds bf16 operands to the score / PV matmuls.
        qkv_ref[...] = qkv.astype(compute_dtype)

        # Trace-time unrolled loop over heads (H is small). Per-head q/k/v are static
        # slices read back from the scratch ref (offset loads, not live-vreg lane shuffles).
        for h in range(num_heads):
            lo = h * head_dim
            qh = qkv_ref[:, lo:lo + head_dim]                     # (N, d), already scaled
            kh = qkv_ref[:, C + lo:C + lo + head_dim]             # (N, d)
            vh = qkv_ref[:, 2 * C + lo:2 * C + lo + head_dim]     # (N, d)

            # q @ k^T via dot_general contracting on d (no materialized transpose).
            s = lax.dot_general(qh, kh, (((1,), (1,)), ((), ())),
                                preferred_element_type=jnp.float32)   # (N, N) f32
            s = s - jnp.max(s, axis=-1, keepdims=True)            # max-stabilized softmax
            e = jnp.exp(s)
            # Exact reciprocal: returned attn rows sum to 1 (review correctness note);
            # the (N,1) reciprocal is negligible either way.
            inv = pl.reciprocal(jnp.sum(e, axis=-1, keepdims=True), approx=False)
            p = e * inv                                           # (N, N) f32 probabilities

            if attn_ref is not None:
                attn_ref[0, h] = p.astype(attn_ref.dtype)

            o = jnp.dot(p.astype(compute_dtype), vh,
                        preferred_element_type=jnp.float32)       # (N, d) f32

            # Incremental output projection: acc += o_h @ Wproj^T[head h rows] (K=d contraction
            # hides under the attention matmuls); no concat of head outputs.
            contrib = jnp.dot(o.astype(compute_dtype), wproj_ref[h],
                              preferred_element_type=jnp.float32)  # (N, C) f32
            if h == 0:
                acc_ref[...] = contrib
            else:
                acc_ref[...] += contrib

        # Single lane-dense (N, C) store of y.
        y_ref[0] = (acc_ref[...] + bias_ref[...]).astype(y_ref.dtype)

    if with_attn:
        def kernel(x_ref, wqkv_ref, wproj_ref, bias_ref, y_ref, attn_ref, qkv_ref, acc_ref):
            body(x_ref, wqkv_ref, wproj_ref, bias_ref, y_ref, attn_ref, qkv_ref, acc_ref)
    else:
        def kernel(x_ref, wqkv_ref, wproj_ref, bias_ref, y_ref, qkv_ref, acc_ref):
            body(x_ref, wqkv_ref, wproj_ref, bias_ref, y_ref, None, qkv_ref, acc_ref)

    return kernel


def attention_forward(x, qkv_weight, proj_weight, proj_bias, num_heads, *,
                      compute_dtype=jnp.bfloat16, attn_dtype=jnp.float32,
                      return_attn=True):
    """Pallas TPU forward of the ViT Attention module.

    x: (B, N, C).  qkv_weight: (3C, C).  proj_weight: (C, C).  proj_bias: (C,).
    Returns (y, attn) if return_attn else y.  y is (B, N, C) in x.dtype,
    attn is (B, H, N, N) in attn_dtype (use bfloat16 to halve its HBM writeback,
    or return_attn=False to skip it entirely).
    compute_dtype=bfloat16 (default, recommended on v5e/v6e/v7x) uses the bf16 MXU
    path; accumulation and softmax math stay in f32.
    """
    B, N, C = x.shape
    assert C % num_heads == 0
    d = C // num_heads
    scale = d ** (-0.5)
    out_dtype = x.dtype

    # One-time wrapper-side layout work (amortized over the whole grid):
    #  * contraction-ready transposed weights (kernel never transposes a VMEM tile)
    #  * softmax scale folded into the q columns of Wqkv
    #  * Wproj^T pre-reshaped head-major so the per-head read is a contiguous leading index.
    x_c = x.astype(compute_dtype)
    wqkv_f32 = jnp.transpose(qkv_weight).astype(jnp.float32)          # (C, 3C)
    col_scale = jnp.concatenate(
        [jnp.full((C,), scale, jnp.float32), jnp.ones((2 * C,), jnp.float32)])
    wqkv_t = (wqkv_f32 * col_scale[None, :]).astype(compute_dtype)    # (C, 3C), q cols scaled
    wproj_t = jnp.transpose(proj_weight).astype(compute_dtype).reshape(num_heads, d, C)
    bias2d = proj_bias.reshape(1, C).astype(jnp.float32)

    kernel = _make_attn_kernel(num_heads, d, compute_dtype, return_attn)

    # Advisory cost hint so XLA schedules the wrapper-side transposes/casts around the call.
    cbytes = jnp.dtype(compute_dtype).itemsize
    obytes = jnp.dtype(out_dtype).itemsize
    abytes = jnp.dtype(attn_dtype).itemsize
    flops = (2 * B * N * C * 3 * C) + 2 * (2 * B * num_heads * N * N * d) + (2 * B * N * C * C)
    transcendentals = B * num_heads * N * N
    bytes_accessed = (B * N * C * cbytes + 3 * C * C * cbytes + C * C * cbytes + C * 4
                      + B * N * C * obytes
                      + (B * num_heads * N * N * abytes if return_attn else 0))
    cost = pl.CostEstimate(flops=flops, transcendentals=transcendentals,
                           bytes_accessed=bytes_accessed)

    # Explicit VMEM budget: double-buffered per-batch blocks + weights + scratch (+ headroom).
    block_bytes = (N * C * cbytes + N * C * obytes
                   + (num_heads * N * N * abytes if return_attn else 0))
    weight_bytes = 3 * C * C * cbytes + C * C * cbytes + C * 4
    scratch_bytes = N * 3 * C * cbytes + N * C * 4
    vmem_needed = 2 * block_bytes + 2 * weight_bytes + scratch_bytes
    vmem_limit = int(min(max(vmem_needed + (8 << 20), 32 << 20), 64 << 20))

    y_spec = pl.BlockSpec((1, N, C), lambda b: (b, 0, 0))
    if return_attn:
        out_shape = (jax.ShapeDtypeStruct((B, N, C), out_dtype),
                     jax.ShapeDtypeStruct((B, num_heads, N, N), attn_dtype))
        out_specs = (y_spec,
                     pl.BlockSpec((1, num_heads, N, N), lambda b: (b, 0, 0, 0)))
    else:
        out_shape = jax.ShapeDtypeStruct((B, N, C), out_dtype)
        out_specs = y_spec

    out = pl.pallas_call(
        kernel,
        out_shape=out_shape,
        grid_spec=pltpu.PrefetchScalarGridSpec(
            num_scalar_prefetch=0,
            grid=(B,),
            in_specs=[
                pl.BlockSpec((1, N, C), lambda b: (b, 0, 0)),           # per-batch x block
                pl.BlockSpec((C, 3 * C), lambda b: (0, 0)),             # VMEM-resident scaled Wqkv^T
                pl.BlockSpec((num_heads, d, C), lambda b: (0, 0, 0)),   # VMEM-resident Wproj^T (head-major)
                pl.BlockSpec((1, C), lambda b: (0, 0)),                 # VMEM-resident bias
            ],
            out_specs=out_specs,
            scratch_shapes=[
                pltpu.VMEM((N, 3 * C), compute_dtype),                  # parked QKV activations
                pltpu.VMEM((N, C), jnp.float32),                        # output-projection accumulator
            ],
        ),
        compiler_params=pltpu.CompilerParams(
            dimension_semantics=("parallel",),    # batch axis shards across v7x's 2 TCs
            vmem_limit_bytes=vmem_limit),
        cost_estimate=cost,
    )(x_c, wqkv_t, wproj_t, bias2d)

    if return_attn:
        y, attn = out
        return y, attn
    return out


def attention_reference(x, qkv_weight, proj_weight, proj_bias, num_heads):
    """Pure-JAX reference mirroring the PyTorch forward."""
    B, N, C = x.shape
    d = C // num_heads
    scale = d ** (-0.5)
    qkv = jnp.einsum('bnc,oc->bno', x, qkv_weight)               # (B, N, 3C)
    qkv = qkv.reshape(B, N, 3, num_heads, d).transpose(2, 0, 3, 1, 4)
    q, k, v = qkv[0], qkv[1], qkv[2]                             # (B, H, N, d)
    attn = jnp.einsum('bhnd,bhmd->bhnm', q, k) * scale
    attn = jax.nn.softmax(attn, axis=-1)
    out = jnp.einsum('bhnm,bhmd->bhnd', attn, v)
    out = out.transpose(0, 2, 1, 3).reshape(B, N, C)
    out = jnp.einsum('bnc,oc->bno', out, proj_weight) + proj_bias
    return out, attn


if __name__ == "__main__":
    B, N, C = 2, 8, 32
    num_heads = 8

    key = jax.random.PRNGKey(0)
    kx, kqkv, kpw, kpb = jax.random.split(key, 4)
    x = jax.random.normal(kx, (B, N, C), dtype=jnp.float32)
    # Module shapes: qkv Linear(C, 3C, bias=False), proj Linear(C, C, bias=True).
    qkv_weight = jax.random.normal(kqkv, (3 * C, C), dtype=jnp.float32) * 0.05
    proj_weight = jax.random.normal(kpw, (C, C), dtype=jnp.float32) * 0.05
    proj_bias = jax.random.normal(kpb, (C,), dtype=jnp.float32) * 0.05

    y_ref, attn_ref = attention_reference(x, qkv_weight, proj_weight, proj_bias, num_heads)

    # ---- f32 compute path, f32 attention probabilities --------------------
    y32, attn32 = attention_forward(x, qkv_weight, proj_weight, proj_bias, num_heads,
                                    compute_dtype=jnp.float32, attn_dtype=jnp.float32,
                                    return_attn=True)
    jax.block_until_ready(y32)
    jax.block_until_ready(attn32)
    np.testing.assert_allclose(np.asarray(attn32), np.asarray(attn_ref),
                               rtol=1e-2, atol=5e-4)
    np.testing.assert_allclose(np.asarray(y32), np.asarray(y_ref),
                               rtol=1e-2, atol=5e-4)

    # ---- bf16 MXU path (recommended default on v5e/v6e/v7x), bf16 attn ----
    y_bf, attn_bf = attention_forward(x, qkv_weight, proj_weight, proj_bias, num_heads,
                                      compute_dtype=jnp.bfloat16, attn_dtype=jnp.bfloat16,
                                      return_attn=True)
    jax.block_until_ready(y_bf)
    np.testing.assert_allclose(np.asarray(attn_bf.astype(jnp.float32)),
                               np.asarray(attn_ref), rtol=5e-2, atol=1e-2)
    np.testing.assert_allclose(np.asarray(y_bf.astype(jnp.float32)),
                               np.asarray(y_ref), rtol=5e-2, atol=1e-2)

    # ---- y-only variant (skips the attn HBM writeback entirely) -----------
    y_only = attention_forward(x, qkv_weight, proj_weight, proj_bias, num_heads,
                               compute_dtype=jnp.float32, return_attn=False)
    jax.block_until_ready(y_only)
    np.testing.assert_allclose(np.asarray(y_only), np.asarray(y_ref),
                               rtol=1e-2, atol=5e-4)

    print("KERNEL_OK")
</pallas_src>

<mosaic_0001>
module attributes {stable_mosaic.version = 11 : i64} {
  func.func @kernel(%arg0: i32, %arg1: memref<1x8x32xf32, #tpu.memory_space<vmem>>, %arg2: memref<32x96xf32, #tpu.memory_space<vmem>>, %arg3: memref<8x4x32xf32, #tpu.memory_space<vmem>>, %arg4: memref<1x32xf32, #tpu.memory_space<vmem>>, %arg5: memref<1x8x32xf32, #tpu.memory_space<vmem>>, %arg6: memref<1x8x8x8xf32, #tpu.memory_space<vmem>>, %arg7: memref<8x96xf32, #tpu.memory_space<vmem>>, %arg8: memref<8x32xf32, #tpu.memory_space<vmem>>) attributes {dimension_semantics = [#tpu.dimension_semantics<parallel>], iteration_bounds = array<i64: 2>, scalar_prefetch = 0 : i64, scratch_operands = 2 : i64, tpu.core_type = #tpu.core_type<tc>, window_params = [{transform_indices = @transform_0, window_bounds = array<i64: 1, 8, 32>}, {pipeline_mode = #tpu.pipeline_mode<synchronous>, transform_indices = @transform_1, window_bounds = array<i64: 32, 96>}, {pipeline_mode = #tpu.pipeline_mode<synchronous>, transform_indices = @transform_2, window_bounds = array<i64: 8, 4, 32>}, {pipeline_mode = #tpu.pipeline_mode<synchronous>, transform_indices = @transform_3, window_bounds = array<i64: 1, 32>}, {transform_indices = @transform_4, window_bounds = array<i64: 1, 8, 32>}, {transform_indices = @transform_5, window_bounds = array<i64: 1, 8, 8, 8>}]} {
    %c0 = arith.constant 0 : index
    %c0_0 = arith.constant 0 : index
    %c0_1 = arith.constant 0 : index
    %0 = vector.load %arg1[%c0, %c0_0, %c0_1] : memref<1x8x32xf32, #tpu.memory_space<vmem>>, vector<1x8x32xf32>
    %1 = vector.shape_cast %0 : vector<1x8x32xf32> to vector<8x32xf32>
    %c0_2 = arith.constant 0 : index
    %c0_3 = arith.constant 0 : index
    %2 = vector.load %arg2[%c0_2, %c0_3] : memref<32x96xf32, #tpu.memory_space<vmem>>, vector<32x96xf32>
    %cst = arith.constant dense<0.000000e+00> : vector<8x96xf32>
    %3 = tpu.matmul %1, %2, %cst {dimension_numbers = #tpu.dot_dimension_numbers<[1], [0], [0], [1], [0, 0, 1, 1], [], []>} : vector<8x32xf32>, vector<32x96xf32>, vector<8x96xf32> -> vector<8x96xf32>
    %c0_4 = arith.constant 0 : index
    %c0_5 = arith.constant 0 : index
    %4 = vector.load %arg7[%c0_4, %c0_5] : memref<8x96xf32, #tpu.memory_space<vmem>>, vector<8x96xf32>
    tpu.vector_store %arg7[%c0_4, %c0_5], %3 {strides = array<i32>} : memref<8x96xf32, #tpu.memory_space<vmem>>, vector<8x96xf32>,
    %c0_6 = arith.constant 0 : index
    %c0_7 = arith.constant 0 : index
    %5 = vector.load %arg7[%c0_6, %c0_7] : memref<8x96xf32, #tpu.memory_space<vmem>>, vector<8x4xf32>
    %c0_8 = arith.constant 0 : index
    %c32 = arith.constant 32 : index
    %6 = vector.load %arg7[%c0_8, %c32] : memref<8x96xf32, #tpu.memory_space<vmem>>, vector<8x4xf32>
    %c0_9 = arith.constant 0 : index
    %c64 = arith.constant 64 : index
    %7 = vector.load %arg7[%c0_9, %c64] : memref<8x96xf32, #tpu.memory_space<vmem>>, vector<8x4xf32>
    %cst_10 = arith.constant dense<0.000000e+00> : vector<8x8xf32>
    %8 = tpu.matmul %5, %6, %cst_10 {dimension_numbers = #tpu.dot_dimension_numbers<[1], [1], [0], [0], [0, 0, 1, 0], [], []>} : vector<8x4xf32>, vector<8x4xf32>, vector<8x8xf32> -> vector<8x8xf32>
    %cst_11 = arith.constant dense<0xFF800000> : vector<8xf32>
    %9 = vector.multi_reduction <maximumf>, %8, %cst_11 [1] : vector<8x8xf32> to vector<8xf32>
    %10 = vector.shape_cast %9 : vector<8xf32> to vector<8x1xf32>
    %11 = vector.broadcast %10 : vector<8x1xf32> to vector<8x8xf32>
    %12 = arith.subf %8, %11 : vector<8x8xf32>
    %13 = math.exp %12 : vector<8x8xf32>
    %cst_12 = arith.constant dense<0.000000e+00> : vector<8xf32>
    %14 = vector.multi_reduction <add>, %13, %cst_12 [1] : vector<8x8xf32> to vector<8xf32>
    %15 = vector.shape_cast %14 : vector<8xf32> to vector<8x1xf32>
    %16 = tpu.reciprocal %15 : vector<8x1xf32> -> vector<8x1xf32>
    %17 = vector.broadcast %16 : vector<8x1xf32> to vector<8x8xf32>
    %18 = arith.mulf %13, %17 : vector<8x8xf32>
    %c0_13 = arith.constant 0 : index
    %c0_14 = arith.constant 0 : index
    %c0_15 = arith.constant 0 : index
    %c0_16 = arith.constant 0 : index
    %19 = vector.load %arg6[%c0_13, %c0_14, %c0_15, %c0_16] : memref<1x8x8x8xf32, #tpu.memory_space<vmem>>, vector<1x1x8x8xf32>
    %20 = vector.shape_cast %19 : vector<1x1x8x8xf32> to vector<8x8xf32>
    %21 = vector.shape_cast %18 : vector<8x8xf32> to vector<1x1x8x8xf32>
    tpu.vector_store %arg6[%c0_13, %c0_14, %c0_15, %c0_16], %21 {strides = array<i32>} : memref<1x8x8x8xf32, #tpu.memory_space<vmem>>, vector<1x1x8x8xf32>,
    %cst_17 = arith.constant dense<0.000000e+00> : vector<8x4xf32>
    %22 = tpu.matmul %18, %7, %cst_17 {dimension_numbers = #tpu.dot_dimension_numbers<[1], [0], [0], [1], [0, 0, 1, 1], [], []>} : vector<8x8xf32>, vector<8x4xf32>, vector<8x4xf32> -> vector<8x4xf32>
    %c0_18 = arith.constant 0 : index
    %c0_19 = arith.constant 0 : index
    %c0_20 = arith.constant 0 : index
    %23 = vector.load %arg3[%c0_18, %c0_19, %c0_20] : memref<8x4x32xf32, #tpu.memory_space<vmem>>, vector<1x4x32xf32>
    %24 = vector.shape_cast %23 : vector<1x4x32xf32> to vector<4x32xf32>
    %cst_21 = arith.constant dense<0.000000e+00> : vector<8x32xf32>
    %25 = tpu.matmul %22, %24, %cst_21 {dimension_numbers = #tpu.dot_dimension_numbers<[1], [0], [0], [1], [0, 0, 1, 1], [], []>} : vector<8x4xf32>, vector<4x32xf32>, vector<8x32xf32> -> vector<8x32xf32>
    %c0_22 = arith.constant 0 : index
    %c0_23 = arith.constant 0 : index
    %26 = vector.load %arg8[%c0_22, %c0_23] : memref<8x32xf32, #tpu.memory_space<vmem>>, vector<8x32xf32>
    tpu.vector_store %arg8[%c0_22, %c0_23], %25 {strides = array<i32>} : memref<8x32xf32, #tpu.memory_space<vmem>>, vector<8x32xf32>,
    %c0_24 = arith.constant 0 : index
    %c4 = arith.constant 4 : index
    %27 = vector.load %arg7[%c0_24, %c4] : memref<8x96xf32, #tpu.memory_space<vmem>>, vector<8x4xf32>
    %c0_25 = arith.constant 0 : index
    %c36 = arith.constant 36 : index
    %28 = vector.load %arg7[%c0_25, %c36] : memref<8x96xf32, #tpu.memory_space<vmem>>, vector<8x4xf32>
    %c0_26 = arith.constant 0 : index
    %c68 = arith.constant 68 : index
    %29 = vector.load %arg7[%c0_26, %c68] : memref<8x96xf32, #tpu.memory_space<vmem>>, vector<8x4xf32>
    %cst_27 = arith.constant dense<0.000000e+00> : vector<8x8xf32>
    %30 = tpu.matmul %27, %28, %cst_27 {dimension_numbers = #tpu.dot_dimension_numbers<[1], [1], [0], [0], [0, 0, 1, 0], [], []>} : vector<8x4xf32>, vector<8x4xf32>, vector<8x8xf32> -> vector<8x8xf32>
    %cst_28 = arith.constant dense<0xFF800000> : vector<8xf32>
    %31 = vector.multi_reduction <maximumf>, %30, %cst_28 [1] : vector<8x8xf32> to vector<8xf32>
    %32 = vector.shape_cast %31 : vector<8xf32> to vector<8x1xf32>
    %33 = vector.broadcast %32 : vector<8x1xf32> to vector<8x8xf32>
    %34 = arith.subf %30, %33 : vector<8x8xf32>
    %35 = math.exp %34 : vector<8x8xf32>
    %cst_29 = arith.constant dense<0.000000e+00> : vector<8xf32>
    %36 = vector.multi_reduction <add>, %35, %cst_29 [1] : vector<8x8xf32> to vector<8xf32>
    %37 = vector.shape_cast %36 : vector<8xf32> to vector<8x1xf32>
    %38 = tpu.reciprocal %37 : vector<8x1xf32> -> vector<8x1xf32>
    %39 = vector.broadcast %38 : vector<8x1xf32> to vector<8x8xf32>
    %40 = arith.mulf %35, %39 : vector<8x8xf32>
    %c0_30 = arith.constant 0 : index
    %c1 = arith.constant 1 : index
    %c0_31 = arith.constant 0 : index
    %c0_32 = arith.constant 0 : index
    %41 = vector.load %arg6[%c0_30, %c1, %c0_31, %c0_32] : memref<1x8x8x8xf32, #tpu.memory_space<vmem>>, vector<1x1x8x8xf32>
    %42 = vector.shape_cast %41 : vector<1x1x8x8xf32> to vector<8x8xf32>
    %43 = vector.shape_cast %40 : vector<8x8xf32> to vector<1x1x8x8xf32>
    tpu.vector_store %arg6[%c0_30, %c1, %c0_31, %c0_32], %43 {strides = array<i32>} : memref<1x8x8x8xf32, #tpu.memory_space<vmem>>, vector<1x1x8x8xf32>,
    %cst_33 = arith.constant dense<0.000000e+00> : vector<8x4xf32>
    %44 = tpu.matmul %40, %29, %cst_33 {dimension_numbers = #tpu.dot_dimension_numbers<[1], [0], [0], [1], [0, 0, 1, 1], [], []>} : vector<8x8xf32>, vector<8x4xf32>, vector<8x4xf32> -> vector<8x4xf32>
    %c1_34 = arith.constant 1 : index
    %c0_35 = arith.constant 0 : index
    %c0_36 = arith.constant 0 : index
    %45 = vector.load %arg3[%c1_34, %c0_35, %c0_36] : memref<8x4x32xf32, #tpu.memory_space<vmem>>, vector<1x4x32xf32>
    %46 = vector.shape_cast %45 : vector<1x4x32xf32> to vector<4x32xf32>
    %cst_37 = arith.constant dense<0.000000e+00> : vector<8x32xf32>
    %47 = tpu.matmul %44, %46, %cst_37 {dimension_numbers = #tpu.dot_dimension_numbers<[1], [0], [0], [1], [0, 0, 1, 1], [], []>} : vector<8x4xf32>, vector<4x32xf32>, vector<8x32xf32> -> vector<8x32xf32>
    %c0_38 = arith.constant 0 : index
    %c0_39 = arith.constant 0 : index
    %48 = vector.load %arg8[%c0_38, %c0_39] : memref<8x32xf32, #tpu.memory_space<vmem>>, vector<8x32xf32>
    %49 = arith.addf %48, %47 : vector<8x32xf32>
    %c0_40 = arith.constant 0 : index
    %c0_41 = arith.constant 0 : index
    %50 = vector.load %arg8[%c0_40, %c0_41] : memref<8x32xf32, #tpu.memory_space<vmem>>, vector<8x32xf32>
    tpu.vector_store %arg8[%c0_40, %c0_41], %49 {strides = array<i32>} : memref<8x32xf32, #tpu.memory_space<vmem>>, vector<8x32xf32>,
    %c0_42 = arith.constant 0 : index
    %c8 = arith.constant 8 : index
    %51 = vector.load %arg7[%c0_42, %c8] : memref<8x96xf32, #tpu.memory_space<vmem>>, vector<8x4xf32>
    %c0_43 = arith.constant 0 : index
    %c40 = arith.constant 40 : index
    %52 = vector.load %arg7[%c0_43, %c40] : memref<8x96xf32, #tpu.memory_space<vmem>>, vector<8x4xf32>
    %c0_44 = arith.constant 0 : index
    %c72 = arith.constant 72 : index
    %53 = vector.load %arg7[%c0_44, %c72] : memref<8x96xf32, #tpu.memory_space<vmem>>, vector<8x4xf32>
    %cst_45 = arith.constant dense<0.000000e+00> : vector<8x8xf32>
    %54 = tpu.matmul %51, %52, %cst_45 {dimension_numbers = #tpu.dot_dimension_numbers<[1], [1], [0], [0], [0, 0, 1, 0], [], []>} : vector<8x4xf32>, vector<8x4xf32>, vector<8x8xf32> -> vector<8x8xf32>
    %cst_46 = arith.constant dense<0xFF800000> : vector<8xf32>
    %55 = vector.multi_reduction <maximumf>, %54, %cst_46 [1] : vector<8x8xf32> to vector<8xf32>
    %56 = vector.shape_cast %55 : vector<8xf32> to vector<8x1xf32>
    %57 = vector.broadcast %56 : vector<8x1xf32> to vector<8x8xf32>
    %58 = arith.subf %54, %57 : vector<8x8xf32>
    %59 = math.exp %58 : vector<8x8xf32>
    %cst_47 = arith.constant dense<0.000000e+00> : vector<8xf32>
    %60 = vector.multi_reduction <add>, %59, %cst_47 [1] : vector<8x8xf32> to vector<8xf32>
    %61 = vector.shape_cast %60 : vector<8xf32> to vector<8x1xf32>
    %62 = tpu.reciprocal %61 : vector<8x1xf32> -> vector<8x1xf32>
    %63 = vector.broadcast %62 : vector<8x1xf32> to vector<8x8xf32>
    %64 = arith.mulf %59, %63 : vector<8x8xf32>
    %c0_48 = arith.constant 0 : index
    %c2 = arith.constant 2 : index
    %c0_49 = arith.constant 0 : index
    %c0_50 = arith.constant 0 : index
    %65 = vector.load %arg6[%c0_48, %c2, %c0_49, %c0_50] : memref<1x8x8x8xf32, #tpu.memory_space<vmem>>, vector<1x1x8x8xf32>
    %66 = vector.shape_cast %65 : vector<1x1x8x8xf32> to vector<8x8xf32>
    %67 = vector.shape_cast %64 : vector<8x8xf32> to vector<1x1x8x8xf32>
    tpu.vector_store %arg6[%c0_48, %c2, %c0_49, %c0_50], %67 {strides = array<i32>} : memref<1x8x8x8xf32, #tpu.memory_space<vmem>>, vector<1x1x8x8xf32>,
    %cst_51 = arith.constant dense<0.000000e+00> : vector<8x4xf32>
    %68 = tpu.matmul %64, %53, %cst_51 {dimension_numbers = #tpu.dot_dimension_numbers<[1], [0], [0], [1], [0, 0, 1, 1], [], []>} : vector<8x8xf32>, vector<8x4xf32>, vector<8x4xf32> -> vector<8x4xf32>
    %c2_52 = arith.constant 2 : index
    %c0_53 = arith.constant 0 : index
    %c0_54 = arith.constant 0 : index
    %69 = vector.load %arg3[%c2_52, %c0_53, %c0_54] : memref<8x4x32xf32, #tpu.memory_space<vmem>>, vector<1x4x32xf32>
    %70 = vector.shape_cast %69 : vector<1x4x32xf32> to vector<4x32xf32>
    %cst_55 = arith.constant dense<0.000000e+00> : vector<8x32xf32>
    %71 = tpu.matmul %68, %70, %cst_55 {dimension_numbers = #tpu.dot_dimension_numbers<[1], [0], [0], [1], [0, 0, 1, 1], [], []>} : vector<8x4xf32>, vector<4x32xf32>, vector<8x32xf32> -> vector<8x32xf32>
    %c0_56 = arith.constant 0 : index
    %c0_57 = arith.constant 0 : index
    %72 = vector.load %arg8[%c0_56, %c0_57] : memref<8x32xf32, #tpu.memory_space<vmem>>, vector<8x32xf32>
    %73 = arith.addf %72, %71 : vector<8x32xf32>
    %c0_58 = arith.constant 0 : index
    %c0_59 = arith.constant 0 : index
    %74 = vector.load %arg8[%c0_58, %c0_59] : memref<8x32xf32, #tpu.memory_space<vmem>>, vector<8x32xf32>
    tpu.vector_store %arg8[%c0_58, %c0_59], %73 {strides = array<i32>} : memref<8x32xf32, #tpu.memory_space<vmem>>, vector<8x32xf32>,
    %c0_60 = arith.constant 0 : index
    %c12 = arith.constant 12 : index
    %75 = vector.load %arg7[%c0_60, %c12] : memref<8x96xf32, #tpu.memory_space<vmem>>, vector<8x4xf32>
    %c0_61 = arith.constant 0 : index
    %c44 = arith.constant 44 : index
    %76 = vector.load %arg7[%c0_61, %c44] : memref<8x96xf32, #tpu.memory_space<vmem>>, vector<8x4xf32>
    %c0_62 = arith.constant 0 : index
    %c76 = arith.constant 76 : index
    %77 = vector.load %arg7[%c0_62, %c76] : memref<8x96xf32, #tpu.memory_space<vmem>>, vector<8x4xf32>
    %cst_63 = arith.constant dense<0.000000e+00> : vector<8x8xf32>
    %78 = tpu.matmul %75, %76, %cst_63 {dimension_numbers = #tpu.dot_dimension_numbers<[1], [1], [0], [0], [0, 0, 1, 0], [], []>} : vector<8x4xf32>, vector<8x4xf32>, vector<8x8xf32> -> vector<8x8xf32>
    %cst_64 = arith.constant dense<0xFF800000> : vector<8xf32>
    %79 = vector.multi_reduction <maximumf>, %78, %cst_64 [1] : vector<8x8xf32> to vector<8xf32>
    %80 = vector.shape_cast %79 : vector<8xf32> to vector<8x1xf32>
    %81 = vector.broadcast %80 : vector<8x1xf32> to vector<8x8xf32>
    %82 = arith.subf %78, %81 : vector<8x8xf32>
    %83 = math.exp %82 : vector<8x8xf32>
    %cst_65 = arith.constant dense<0.000000e+00> : vector<8xf32>
    %84 = vector.multi_reduction <add>, %83, %cst_65 [1] : vector<8x8xf32> to vector<8xf32>
    %85 = vector.shape_cast %84 : vector<8xf32> to vector<8x1xf32>
    %86 = tpu.reciprocal %85 : vector<8x1xf32> -> vector<8x1xf32>
    %87 = vector.broadcast %86 : vector<8x1xf32> to vector<8x8xf32>
    %88 = arith.mulf %83, %87 : vector<8x8xf32>
    %c0_66 = arith.constant 0 : index
    %c3 = arith.constant 3 : index
    %c0_67 = arith.constant 0 : index
    %c0_68 = arith.constant 0 : index
    %89 = vector.load %arg6[%c0_66, %c3, %c0_67, %c0_68] : memref<1x8x8x8xf32, #tpu.memory_space<vmem>>, vector<1x1x8x8xf32>
    %90 = vector.shape_cast %89 : vector<1x1x8x8xf32> to vector<8x8xf32>
    %91 = vector.shape_cast %88 : vector<8x8xf32> to vector<1x1x8x8xf32>
    tpu.vector_store %arg6[%c0_66, %c3, %c0_67, %c0_68], %91 {strides = array<i32>} : memref<1x8x8x8xf32, #tpu.memory_space<vmem>>, vector<1x1x8x8xf32>,
    %cst_69 = arith.constant dense<0.000000e+00> : vector<8x4xf32>
    %92 = tpu.matmul %88, %77, %cst_69 {dimension_numbers = #tpu.dot_dimension_numbers<[1], [0], [0], [1], [0, 0, 1, 1], [], []>} : vector<8x8xf32>, vector<8x4xf32>, vector<8x4xf32> -> vector<8x4xf32>
    %c3_70 = arith.constant 3 : index
    %c0_71 = arith.constant 0 : index
    %c0_72 = arith.constant 0 : index
    %93 = vector.load %arg3[%c3_70, %c0_71, %c0_72] : memref<8x4x32xf32, #tpu.memory_space<vmem>>, vector<1x4x32xf32>
    %94 = vector.shape_cast %93 : vector<1x4x32xf32> to vector<4x32xf32>
    %cst_73 = arith.constant dense<0.000000e+00> : vector<8x32xf32>
    %95 = tpu.matmul %92, %94, %cst_73 {dimension_numbers = #tpu.dot_dimension_numbers<[1], [0], [0], [1], [0, 0, 1, 1], [], []>} : vector<8x4xf32>, vector<4x32xf32>, vector<8x32xf32> -> vector<8x32xf32>
    %c0_74 = arith.constant 0 : index
    %c0_75 = arith.constant 0 : index
    %96 = vector.load %arg8[%c0_74, %c0_75] : memref<8x32xf32, #tpu.memory_space<vmem>>, vector<8x32xf32>
    %97 = arith.addf %96, %95 : vector<8x32xf32>
    %c0_76 = arith.constant 0 : index
    %c0_77 = arith.constant 0 : index
    %98 = vector.load %arg8[%c0_76, %c0_77] : memref<8x32xf32, #tpu.memory_space<vmem>>, vector<8x32xf32>
    tpu.vector_store %arg8[%c0_76, %c0_77], %97 {strides = array<i32>} : memref<8x32xf32, #tpu.memory_space<vmem>>, vector<8x32xf32>,
    %c0_78 = arith.constant 0 : index
    %c16 = arith.constant 16 : index
    %99 = vector.load %arg7[%c0_78, %c16] : memref<8x96xf32, #tpu.memory_space<vmem>>, vector<8x4xf32>
    %c0_79 = arith.constant 0 : index
    %c48 = arith.constant 48 : index
    %100 = vector.load %arg7[%c0_79, %c48] : memref<8x96xf32, #tpu.memory_space<vmem>>, vector<8x4xf32>
    %c0_80 = arith.constant 0 : index
    %c80 = arith.constant 80 : index
    %101 = vector.load %arg7[%c0_80, %c80] : memref<8x96xf32, #tpu.memory_space<vmem>>, vector<8x4xf32>
    %cst_81 = arith.constant dense<0.000000e+00> : vector<8x8xf32>
    %102 = tpu.matmul %99, %100, %cst_81 {dimension_numbers = #tpu.dot_dimension_numbers<[1], [1], [0], [0], [0, 0, 1, 0], [], []>} : vector<8x4xf32>, vector<8x4xf32>, vector<8x8xf32> -> vector<8x8xf32>
    %cst_82 = arith.constant dense<0xFF800000> : vector<8xf32>
    %103 = vector.multi_reduction <maximumf>, %102, %cst_82 [1] : vector<8x8xf32> to vector<8xf32>
    %104 = vector.shape_cast %103 : vector<8xf32> to vector<8x1xf32>
    %105 = vector.broadcast %104 : vector<8x1xf32> to vector<8x8xf32>
    %106 = arith.subf %102, %105 : vector<8x8xf32>
    %107 = math.exp %106 : vector<8x8xf32>
    %cst_83 = arith.constant dense<0.000000e+00> : vector<8xf32>
    %108 = vector.multi_reduction <add>, %107, %cst_83 [1] : vector<8x8xf32> to vector<8xf32>
    %109 = vector.shape_cast %108 : vector<8xf32> to vector<8x1xf32>
    %110 = tpu.reciprocal %109 : vector<8x1xf32> -> vector<8x1xf32>
    %111 = vector.broadcast %110 : vector<8x1xf32> to vector<8x8xf32>
    %112 = arith.mulf %107, %111 : vector<8x8xf32>
    %c0_84 = arith.constant 0 : index
    %c4_85 = arith.constant 4 : index
    %c0_86 = arith.constant 0 : index
    %c0_87 = arith.constant 0 : index
    %113 = vector.load %arg6[%c0_84, %c4_85, %c0_86, %c0_87] : memref<1x8x8x8xf32, #tpu.memory_space<vmem>>, vector<1x1x8x8xf32>
    %114 = vector.shape_cast %113 : vector<1x1x8x8xf32> to vector<8x8xf32>
    %115 = vector.shape_cast %112 : vector<8x8xf32> to vector<1x1x8x8xf32>
    tpu.vector_store %arg6[%c0_84, %c4_85, %c0_86, %c0_87], %115 {strides = array<i32>} : memref<1x8x8x8xf32, #tpu.memory_space<vmem>>, vector<1x1x8x8xf32>,
    %cst_88 = arith.constant dense<0.000000e+00> : vector<8x4xf32>
    %116 = tpu.matmul %112, %101, %cst_88 {dimension_numbers = #tpu.dot_dimension_numbers<[1], [0], [0], [1], [0, 0, 1, 1], [], []>} : vector<8x8xf32>, vector<8x4xf32>, vector<8x4xf32> -> vector<8x4xf32>
    %c4_89 = arith.constant 4 : index
    %c0_90 = arith.constant 0 : index
    %c0_91 = arith.constant 0 : index
    %117 = vector.load %arg3[%c4_89, %c0_90, %c0_91] : memref<8x4x32xf32, #tpu.memory_space<vmem>>, vector<1x4x32xf32>
    %118 = vector.shape_cast %117 : vector<1x4x32xf32> to vector<4x32xf32>
    %cst_92 = arith.constant dense<0.000000e+00> : vector<8x32xf32>
    %119 = tpu.matmul %116, %118, %cst_92 {dimension_numbers = #tpu.dot_dimension_numbers<[1], [0], [0], [1], [0, 0, 1, 1], [], []>} : vector<8x4xf32>, vector<4x32xf32>, vector<8x32xf32> -> vector<8x32xf32>
    %c0_93 = arith.constant 0 : index
    %c0_94 = arith.constant 0 : index
    %120 = vector.load %arg8[%c0_93, %c0_94] : memref<8x32xf32, #tpu.memory_space<vmem>>, vector<8x32xf32>
    %121 = arith.addf %120, %119 : vector<8x32xf32>
    %c0_95 = arith.constant 0 : index
    %c0_96 = arith.constant 0 : index
    %122 = vector.load %arg8[%c0_95, %c0_96] : memref<8x32xf32, #tpu.memory_space<vmem>>, vector<8x32xf32>
    tpu.vector_store %arg8[%c0_95, %c0_96], %121 {strides = array<i32>} : memref<8x32xf32, #tpu.memory_space<vmem>>, vector<8x32xf32>,
    %c0_97 = arith.constant 0 : index
    %c20 = arith.constant 20 : index
    %123 = vector.load %arg7[%c0_97, %c20] : memref<8x96xf32, #tpu.memory_space<vmem>>, vector<8x4xf32>
    %c0_98 = arith.constant 0 : index
    %c52 = arith.constant 52 : index
    %124 = vector.load %arg7[%c0_98, %c52] : memref<8x96xf32, #tpu.memory_space<vmem>>, vector<8x4xf32>
    %c0_99 = arith.constant 0 : index
    %c84 = arith.constant 84 : index
    %125 = vector.load %arg7[%c0_99, %c84] : memref<8x96xf32, #tpu.memory_space<vmem>>, vector<8x4xf32>
    %cst_100 = arith.constant dense<0.000000e+00> : vector<8x8xf32>
    %126 = tpu.matmul %123, %124, %cst_100 {dimension_numbers = #tpu.dot_dimension_numbers<[1], [1], [0], [0], [0, 0, 1, 0], [], []>} : vector<8x4xf32>, vector<8x4xf32>, vector<8x8xf32> -> vector<8x8xf32>
    %cst_101 = arith.constant dense<0xFF800000> : vector<8xf32>
    %127 = vector.multi_reduction <maximumf>, %126, %cst_101 [1] : vector<8x8xf32> to vector<8xf32>
    %128 = vector.shape_cast %127 : vector<8xf32> to vector<8x1xf32>
    %129 = vector.broadcast %128 : vector<8x1xf32> to vector<8x8xf32>
    %130 = arith.subf %126, %129 : vector<8x8xf32>
    %131 = math.exp %130 : vector<8x8xf32>
    %cst_102 = arith.constant dense<0.000000e+00> : vector<8xf32>
    %132 = vector.multi_reduction <add>, %131, %cst_102 [1] : vector<8x8xf32> to vector<8xf32>
    %133 = vector.shape_cast %132 : vector<8xf32> to vector<8x1xf32>
    %134 = tpu.reciprocal %133 : vector<8x1xf32> -> vector<8x1xf32>
    %135 = vector.broadcast %134 : vector<8x1xf32> to vector<8x8xf32>
    %136 = arith.mulf %131, %135 : vector<8x8xf32>
    %c0_103 = arith.constant 0 : index
    %c5 = arith.constant 5 : index
    %c0_104 = arith.constant 0 : index
    %c0_105 = arith.constant 0 : index
    %137 = vector.load %arg6[%c0_103, %c5, %c0_104, %c0_105] : memref<1x8x8x8xf32, #tpu.memory_space<vmem>>, vector<1x1x8x8xf32>
    %138 = vector.shape_cast %137 : vector<1x1x8x8xf32> to vector<8x8xf32>
    %139 = vector.shape_cast %136 : vector<8x8xf32> to vector<1x1x8x8xf32>
    tpu.vector_store %arg6[%c0_103, %c5, %c0_104, %c0_105], %139 {strides = array<i32>} : memref<1x8x8x8xf32, #tpu.memory_space<vmem>>, vector<1x1x8x8xf32>,
    %cst_106 = arith.constant dense<0.000000e+00> : vector<8x4xf32>
    %140 = tpu.matmul %136, %125, %cst_106 {dimension_numbers = #tpu.dot_dimension_numbers<[1], [0], [0], [1], [0, 0, 1, 1], [], []>} : vector<8x8xf32>, vector<8x4xf32>, vector<8x4xf32> -> vector<8x4xf32>
    %c5_107 = arith.constant 5 : index
    %c0_108 = arith.constant 0 : index
    %c0_109 = arith.constant 0 : index
    %141 = vector.load %arg3[%c5_107, %c0_108, %c0_109] : memref<8x4x32xf32, #tpu.memory_space<vmem>>, vector<1x4x32xf32>
    %142 = vector.shape_cast %141 : vector<1x4x32xf32> to vector<4x32xf32>
    %cst_110 = arith.constant dense<0.000000e+00> : vector<8x32xf32>
    %143 = tpu.matmul %140, %142, %cst_110 {dimension_numbers = #tpu.dot_dimension_numbers<[1], [0], [0], [1], [0, 0, 1, 1], [], []>} : vector<8x4xf32>, vector<4x32xf32>, vector<8x32xf32> -> vector<8x32xf32>
    %c0_111 = arith.constant 0 : index
    %c0_112 = arith.constant 0 : index
    %144 = vector.load %arg8[%c0_111, %c0_112] : memref<8x32xf32, #tpu.memory_space<vmem>>, vector<8x32xf32>
    %145 = arith.addf %144, %143 : vector<8x32xf32>
    %c0_113 = arith.constant 0 : index
    %c0_114 = arith.constant 0 : index
    %146 = vector.load %arg8[%c0_113, %c0_114] : memref<8x32xf32, #tpu.memory_space<vmem>>, vector<8x32xf32>
    tpu.vector_store %arg8[%c0_113, %c0_114], %145 {strides = array<i32>} : memref<8x32xf32, #tpu.memory_space<vmem>>, vector<8x32xf32>,
    %c0_115 = arith.constant 0 : index
    %c24 = arith.constant 24 : index
    %147 = vector.load %arg7[%c0_115, %c24] : memref<8x96xf32, #tpu.memory_space<vmem>>, vector<8x4xf32>
    %c0_116 = arith.constant 0 : index
    %c56 = arith.constant 56 : index
    %148 = vector.load %arg7[%c0_116, %c56] : memref<8x96xf32, #tpu.memory_space<vmem>>, vector<8x4xf32>
    %c0_117 = arith.constant 0 : index
    %c88 = arith.constant 88 : index
    %149 = vector.load %arg7[%c0_117, %c88] : memref<8x96xf32, #tpu.memory_space<vmem>>, vector<8x4xf32>
    %cst_118 = arith.constant dense<0.000000e+00> : vector<8x8xf32>
    %150 = tpu.matmul %147, %148, %cst_118 {dimension_numbers = #tpu.dot_dimension_numbers<[1], [1], [0], [0], [0, 0, 1, 0], [], []>} : vector<8x4xf32>, vector<8x4xf32>, vector<8x8xf32> -> vector<8x8xf32>
    %cst_119 = arith.constant dense<0xFF800000> : vector<8xf32>
    %151 = vector.multi_reduction <maximumf>, %150, %cst_119 [1] : vector<8x8xf32> to vector<8xf32>
    %152 = vector.shape_cast %151 : vector<8xf32> to vector<8x1xf32>
    %153 = vector.broadcast %152 : vector<8x1xf32> to vector<8x8xf32>
    %154 = arith.subf %150, %153 : vector<8x8xf32>
    %155 = math.exp %154 : vector<8x8xf32>
    %cst_120 = arith.constant dense<0.000000e+00> : vector<8xf32>
    %156 = vector.multi_reduction <add>, %155, %cst_120 [1] : vector<8x8xf32> to vector<8xf32>
    %157 = vector.shape_cast %156 : vector<8xf32> to vector<8x1xf32>
    %158 = tpu.reciprocal %157 : vector<8x1xf32> -> vector<8x1xf32>
    %159 = vector.broadcast %158 : vector<8x1xf32> to vector<8x8xf32>
    %160 = arith.mulf %155, %159 : vector<8x8xf32>
    %c0_121 = arith.constant 0 : index
    %c6 = arith.constant 6 : index
    %c0_122 = arith.constant 0 : index
    %c0_123 = arith.constant 0 : index
    %161 = vector.load %arg6[%c0_121, %c6, %c0_122, %c0_123] : memref<1x8x8x8xf32, #tpu.memory_space<vmem>>, vector<1x1x8x8xf32>
    %162 = vector.shape_cast %161 : vector<1x1x8x8xf32> to vector<8x8xf32>
    %163 = vector.shape_cast %160 : vector<8x8xf32> to vector<1x1x8x8xf32>
    tpu.vector_store %arg6[%c0_121, %c6, %c0_122, %c0_123], %163 {strides = array<i32>} : memref<1x8x8x8xf32, #tpu.memory_space<vmem>>, vector<1x1x8x8xf32>,
    %cst_124 = arith.constant dense<0.000000e+00> : vector<8x4xf32>
    %164 = tpu.matmul %160, %149, %cst_124 {dimension_numbers = #tpu.dot_dimension_numbers<[1], [0], [0], [1], [0, 0, 1, 1], [], []>} : vector<8x8xf32>, vector<8x4xf32>, vector<8x4xf32> -> vector<8x4xf32>
    %c6_125 = arith.constant 6 : index
    %c0_126 = arith.constant 0 : index
    %c0_127 = arith.constant 0 : index
    %165 = vector.load %arg3[%c6_125, %c0_126, %c0_127] : memref<8x4x32xf32, #tpu.memory_space<vmem>>, vector<1x4x32xf32>
    %166 = vector.shape_cast %165 : vector<1x4x32xf32> to vector<4x32xf32>
    %cst_128 = arith.constant dense<0.000000e+00> : vector<8x32xf32>
    %167 = tpu.matmul %164, %166, %cst_128 {dimension_numbers = #tpu.dot_dimension_numbers<[1], [0], [0], [1], [0, 0, 1, 1], [], []>} : vector<8x4xf32>, vector<4x32xf32>, vector<8x32xf32> -> vector<8x32xf32>
    %c0_129 = arith.constant 0 : index
    %c0_130 = arith.constant 0 : index
    %168 = vector.load %arg8[%c0_129, %c0_130] : memref<8x32xf32, #tpu.memory_space<vmem>>, vector<8x32xf32>
    %169 = arith.addf %168, %167 : vector<8x32xf32>
    %c0_131 = arith.constant 0 : index
    %c0_132 = arith.constant 0 : index
    %170 = vector.load %arg8[%c0_131, %c0_132] : memref<8x32xf32, #tpu.memory_space<vmem>>, vector<8x32xf32>
    tpu.vector_store %arg8[%c0_131, %c0_132], %169 {strides = array<i32>} : memref<8x32xf32, #tpu.memory_space<vmem>>, vector<8x32xf32>,
    %c0_133 = arith.constant 0 : index
    %c28 = arith.constant 28 : index
    %171 = vector.load %arg7[%c0_133, %c28] : memref<8x96xf32, #tpu.memory_space<vmem>>, vector<8x4xf32>
    %c0_134 = arith.constant 0 : index
    %c60 = arith.constant 60 : index
    %172 = vector.load %arg7[%c0_134, %c60] : memref<8x96xf32, #tpu.memory_space<vmem>>, vector<8x4xf32>
    %c0_135 = arith.constant 0 : index
    %c92 = arith.constant 92 : index
    %173 = vector.load %arg7[%c0_135, %c92] : memref<8x96xf32, #tpu.memory_space<vmem>>, vector<8x4xf32>
    %cst_136 = arith.constant dense<0.000000e+00> : vector<8x8xf32>
    %174 = tpu.matmul %171, %172, %cst_136 {dimension_numbers = #tpu.dot_dimension_numbers<[1], [1], [0], [0], [0, 0, 1, 0], [], []>} : vector<8x4xf32>, vector<8x4xf32>, vector<8x8xf32> -> vector<8x8xf32>
    %cst_137 = arith.constant dense<0xFF800000> : vector<8xf32>
    %175 = vector.multi_reduction <maximumf>, %174, %cst_137 [1] : vector<8x8xf32> to vector<8xf32>
    %176 = vector.shape_cast %175 : vector<8xf32> to vector<8x1xf32>
    %177 = vector.broadcast %176 : vector<8x1xf32> to vector<8x8xf32>
    %178 = arith.subf %174, %177 : vector<8x8xf32>
    %179 = math.exp %178 : vector<8x8xf32>
    %cst_138 = arith.constant dense<0.000000e+00> : vector<8xf32>
    %180 = vector.multi_reduction <add>, %179, %cst_138 [1] : vector<8x8xf32> to vector<8xf32>
    %181 = vector.shape_cast %180 : vector<8xf32> to vector<8x1xf32>
    %182 = tpu.reciprocal %181 : vector<8x1xf32> -> vector<8x1xf32>
    %183 = vector.broadcast %182 : vector<8x1xf32> to vector<8x8xf32>
    %184 = arith.mulf %179, %183 : vector<8x8xf32>
    %c0_139 = arith.constant 0 : index
    %c7 = arith.constant 7 : index
    %c0_140 = arith.constant 0 : index
    %c0_141 = arith.constant 0 : index
    %185 = vector.load %arg6[%c0_139, %c7, %c0_140, %c0_141] : memref<1x8x8x8xf32, #tpu.memory_space<vmem>>, vector<1x1x8x8xf32>
    %186 = vector.shape_cast %185 : vector<1x1x8x8xf32> to vector<8x8xf32>
    %187 = vector.shape_cast %184 : vector<8x8xf32> to vector<1x1x8x8xf32>
    tpu.vector_store %arg6[%c0_139, %c7, %c0_140, %c0_141], %187 {strides = array<i32>} : memref<1x8x8x8xf32, #tpu.memory_space<vmem>>, vector<1x1x8x8xf32>,
    %cst_142 = arith.constant dense<0.000000e+00> : vector<8x4xf32>
    %188 = tpu.matmul %184, %173, %cst_142 {dimension_numbers = #tpu.dot_dimension_numbers<[1], [0], [0], [1], [0, 0, 1, 1], [], []>} : vector<8x8xf32>, vector<8x4xf32>, vector<8x4xf32> -> vector<8x4xf32>
    %c7_143 = arith.constant 7 : index
    %c0_144 = arith.constant 0 : index
    %c0_145 = arith.constant 0 : index
    %189 = vector.load %arg3[%c7_143, %c0_144, %c0_145] : memref<8x4x32xf32, #tpu.memory_space<vmem>>, vector<1x4x32xf32>
    %190 = vector.shape_cast %189 : vector<1x4x32xf32> to vector<4x32xf32>
    %cst_146 = arith.constant dense<0.000000e+00> : vector<8x32xf32>
    %191 = tpu.matmul %188, %190, %cst_146 {dimension_numbers = #tpu.dot_dimension_numbers<[1], [0], [0], [1], [0, 0, 1, 1], [], []>} : vector<8x4xf32>, vector<4x32xf32>, vector<8x32xf32> -> vector<8x32xf32>
    %c0_147 = arith.constant 0 : index
    %c0_148 = arith.constant 0 : index
    %192 = vector.load %arg8[%c0_147, %c0_148] : memref<8x32xf32, #tpu.memory_space<vmem>>, vector<8x32xf32>
    %193 = arith.addf %192, %191 : vector<8x32xf32>
    %c0_149 = arith.constant 0 : index
    %c0_150 = arith.constant 0 : index
    %194 = vector.load %arg8[%c0_149, %c0_150] : memref<8x32xf32, #tpu.memory_space<vmem>>, vector<8x32xf32>
    tpu.vector_store %arg8[%c0_149, %c0_150], %193 {strides = array<i32>} : memref<8x32xf32, #tpu.memory_space<vmem>>, vector<8x32xf32>,
    %c0_151 = arith.constant 0 : index
    %c0_152 = arith.constant 0 : index
    %195 = vector.load %arg8[%c0_151, %c0_152] : memref<8x32xf32, #tpu.memory_space<vmem>>, vector<8x32xf32>
    %c0_153 = arith.constant 0 : index
    %c0_154 = arith.constant 0 : index
    %196 = vector.load %arg4[%c0_153, %c0_154] : memref<1x32xf32, #tpu.memory_space<vmem>>, vector<1x32xf32>
    %197 = vector.broadcast %196 : vector<1x32xf32> to vector<8x32xf32>
    %198 = arith.addf %195, %197 : vector<8x32xf32>
    %c0_155 = arith.constant 0 : index
    %c0_156 = arith.constant 0 : index
    %c0_157 = arith.constant 0 : index
    %199 = vector.load %arg5[%c0_155, %c0_156, %c0_157] : memref<1x8x32xf32, #tpu.memory_space<vmem>>, vector<1x8x32xf32>
    %200 = vector.shape_cast %199 : vector<1x8x32xf32> to vector<8x32xf32>
    %201 = vector.shape_cast %198 : vector<8x32xf32> to vector<1x8x32xf32>
    tpu.vector_store %arg5[%c0_155, %c0_156, %c0_157], %201 {strides = array<i32>} : memref<1x8x32xf32, #tpu.memory_space<vmem>>, vector<1x8x32xf32>,
    return
  }
  func.func @transform_0(%arg0: i32) -> (i32, i32, i32) {
    %c0_i32 = arith.constant 0 : i32
    %c0_i32_0 = arith.constant 0 : i32
    %c0_i32_1 = arith.constant 0 : i32
    return %arg0, %c0_i32, %c0_i32_0 : i32, i32, i32
  }
  func.func @transform_1(%arg0: i32) -> (i32, i32) {
    %c0_i32 = arith.constant 0 : i32
    %c0_i32_0 = arith.constant 0 : i32
    %c0_i32_1 = arith.constant 0 : i32
    return %c0_i32, %c0_i32_0 : i32, i32
  }
  func.func @transform_2(%arg0: i32) -> (i32, i32, i32) {
    %c0_i32 = arith.constant 0 : i32
    %c0_i32_0 = arith.constant 0 : i32
    %c0_i32_1 = arith.constant 0 : i32
    %c0_i32_2 = arith.constant 0 : i32
    return %c0_i32, %c0_i32_0, %c0_i32_1 : i32, i32, i32
  }
  func.func @transform_3(%arg0: i32) -> (i32, i32) {
    %c0_i32 = arith.constant 0 : i32
    %c0_i32_0 = arith.constant 0 : i32
    %c0_i32_1 = arith.constant 0 : i32
    return %c0_i32, %c0_i32_0 : i32, i32
  }
  func.func @transform_4(%arg0: i32) -> (i32, i32, i32) {
    %c0_i32 = arith.constant 0 : i32
    %c0_i32_0 = arith.constant 0 : i32
    %c0_i32_1 = arith.constant 0 : i32
    return %arg0, %c0_i32, %c0_i32_0 : i32, i32, i32
  }
  func.func @transform_5(%arg0: i32) -> (i32, i32, i32, i32) {
    %c0_i32 = arith.constant 0 : i32
    %c0_i32_0 = arith.constant 0 : i32
    %c0_i32_1 = arith.constant 0 : i32
    %c0_i32_2 = arith.constant 0 : i32
    return %arg0, %c0_i32, %c0_i32_0, %c0_i32_1 : i32, i32, i32, i32
  }
}

</mosaic_0001>

<llo_original>
// kernel: tpu_custom_call.1
$region0: #{tpu_custom_call.1}
  #allocation0 [shape = 'u32[]', space=smem, size = 0x4, offset = 0x4, fixed_abs, tag = 'smem constant byte address 0x4 - core index']
  #allocation1 [shape = 'u32[144,128]{1,0:T(1,128)}', space=vmem, size = 0x12000, scoped, tag = 'internal scratch']
  #allocation2 [shape = 'f32[8,96]{1,0:T(8,128)}', space=vmem, size = 0x1000, scoped, tag = 'scratch operand']
  #allocation3 [shape = 'f32[8,32]{1,0:T(8,128)}', space=vmem, size = 0x1000, scoped, tag = 'scratch operand']
  %s0 = inlined_call_operand.hbm [shape: f32[2,8,32], index: 0, kind: input, shape index: {}]
  %s1 = inlined_call_operand.hbm [shape: f32[32,96], index: 1, kind: input, shape index: {}]
  %s2 = inlined_call_operand.hbm [shape: f32[8,4,32], index: 2, kind: input, shape index: {}]
  %s3 = inlined_call_operand.vmem [shape: f32[1,32], index: 3, kind: input, shape index: {}]
  %s4 = inlined_call_operand.hbm [shape: f32[2,8,32], index: 4, kind: output, shape index: {0}]
  %s5 = inlined_call_operand.hbm [shape: f32[2,8,8,8], index: 5, kind: output, shape index: {1}]
  %6 = xla_tuple %s4, %s5
  %s7 = sld [smem:[#allocation0]]
  $region69: #{tpu_custom_call.1} parent=0
    _
  %s9 = ssub.s32 1, %s7
  %s10 = scalar_select 0, %s9, %s7
  $region1: #{tpu_custom_call.1} parent=0
    #allocation4 [shape = 'u8[8192]{0}', space=vmem, size = 0x2000, scoped, tag = 'input window, operand 0']
    #allocation5 [shape = 's32[2]{0}', space=sflag, size = 0x8, scoped, tag = 'scoped memory for tpu_custom_call.1']
    #allocation6 [shape = 's32[2]{0}', space=sflag, size = 0x8, scoped, tag = 'scoped memory for tpu_custom_call.1']
    #allocation7 [shape = 'u8[16384]{0}', space=vmem, size = 0x4000, scoped, tag = 'input window, operand 1, single buffered']
    #allocation8 [shape = 's32[1]{0}', space=sflag, size = 0x4, scoped, tag = 'scoped memory for tpu_custom_call.1']
    #allocation9 [shape = 'u8[16384]{0}', space=vmem, size = 0x4000, scoped, tag = 'input window, operand 2, single buffered']
    #allocation10 [shape = 'u8[8192]{0}', space=vmem, size = 0x2000, scoped, tag = 'output window, operand 0']
    #allocation11 [shape = 'u8[65536]{0}', space=vmem, size = 0x10000, scoped, tag = 'output window, operand 1']
    #allocation12 [shape = 's32[2]{0}', space=sflag, size = 0x8, scoped, tag = 'scoped memory for tpu_custom_call.1']
    %11 = vsyncpa [#allocation5], 0
    %s12 = scalar_lea.sflag [#allocation5], 1
    %13 = vsyncpa %s12, 0
    %14 = vsyncpa [#allocation8], 0
    %15 = vsyncpa [#allocation6], 0
    %s16 = scalar_lea.sflag [#allocation6], 1
    %17 = vsyncpa %s16, 0
    %18 = vsyncpa [#allocation12], 0
    %s19 = scalar_lea.sflag [#allocation12], 1
    %20 = vsyncpa %s19, 0
    loop: start=0, step=1, limit=4
    $region2: #{tpu_custom_call.1} parent=1 // loop_pre_header
      _
    $region3: #{tpu_custom_call.1} parent=1 // loop_header
      %s22 = sphi 0, %s26
      %p23 = scmp.ge.s32.totalorder %s22, 4
      %s32 = sphi 0, %s34
      %s35 = sphi 0, %s32
      %s36 = sphi 0, %s35
      %s52 = sphi 0, %s36
      %s56 = sphi 0, %s56
      %s58 = sphi 0, %s56
      %s59 = sphi 0, %s58
      %s73 = sphi 0, %s59
      %s77 = sphi 0, %s77
      %s79 = sphi 0, %s77
      %s80 = sphi 0, %s79
      %s94 = sphi 0, %s80
      %s98 = sphi 0, %s98
      %s100 = sphi 0, %s98
      %s101 = sphi 0, %s100
      %s115 = sphi 0, %s101
      %s121 = sphi 0, %s123
      %s124 = sphi 0, %s121
      %s125 = sphi 0, %s124
      %s141 = sphi 0, %s125
      %s147 = sphi 0, %s149
      %s150 = sphi 0, %s147
      %s151 = sphi 0, %s150
      %s167 = sphi 0, %s151
    $region4: #{tpu_custom_call.1} parent=1 // loop_header_branch
      %25 = sbr.rel (%p23) target = $region8
    $region5: #{tpu_custom_call.1} parent=1 // loop_body
      %s27 = ssub.s32 %s22, 1
      %s28 = ssub.s32 %s22, 2
      %s29 = sadd.s32 %s22, 1
      %s30 = ssub.s32 %s22, %s29
      %p31 = scmp.eq.s32.totalorder %s30, 0
      %s33 = sadd.s32 %s32, 1
      %s34 = scalar_select %p31, %s32, %s33
      %p37 = pneg %p31
      %p38 = scmp.eq.s32.totalorder %s22, 1
      %p39 = por %p37, %p38
      %p40 = scmp.ne.s32.totalorder %s32, %s35
      %p41 = scmp.eq.s32.totalorder %s22, 0
      %p42 = por %p40, %p41
      %p43 = scmp.ne.s32.totalorder %s32, %s35
      %p44 = scmp.eq.s32.totalorder %s27, 1
      %p45 = por %p43, %p44
      %p46 = scmp.ne.s32.totalorder %s35, %s36
      %p47 = scmp.eq.s32.totalorder %s27, 0
      %p48 = por %p46, %p47
      %p49 = scmp.ne.s32.totalorder %s35, %s36
      %p50 = scmp.eq.s32.totalorder %s28, 1
      %p51 = por %p49, %p50
      %p53 = scmp.ne.s32.totalorder %s36, %s52
      %p54 = scmp.eq.s32.totalorder %s28, 0
      %p55 = por %p53, %p54
      %s57 = sadd.s32 %s56, 1
      %p60 = scmp.eq.s32.totalorder %s22, 1
      %p61 = scmp.ne.s32.totalorder %s56, %s58
      %p62 = scmp.eq.s32.totalorder %s22, 0
      %p63 = por %p61, %p62
      %p64 = scmp.ne.s32.totalorder %s56, %s58
      %p65 = scmp.eq.s32.totalorder %s27, 1
      %p66 = por %p64, %p65
      %p67 = scmp.ne.s32.totalorder %s58, %s59
      %p68 = scmp.eq.s32.totalorder %s27, 0
      %p69 = por %p67, %p68
      %p70 = scmp.ne.s32.totalorder %s58, %s59
      %p71 = scmp.eq.s32.totalorder %s28, 1
      %p72 = por %p70, %p71
      %p74 = scmp.ne.s32.totalorder %s59, %s73
      %p75 = scmp.eq.s32.totalorder %s28, 0
      %p76 = por %p74, %p75
      %s78 = sadd.s32 %s77, 1
      %p81 = scmp.eq.s32.totalorder %s22, 1
      %p82 = scmp.ne.s32.totalorder %s77, %s79
      %p83 = scmp.eq.s32.totalorder %s22, 0
      %p84 = por %p82, %p83
      %p85 = scmp.ne.s32.totalorder %s77, %s79
      %p86 = scmp.eq.s32.totalorder %s27, 1
      %p87 = por %p85, %p86
      %p88 = scmp.ne.s32.totalorder %s79, %s80
      %p89 = scmp.eq.s32.totalorder %s27, 0
      %p90 = por %p88, %p89
      %p91 = scmp.ne.s32.totalorder %s79, %s80
      %p92 = scmp.eq.s32.totalorder %s28, 1
      %p93 = por %p91, %p92
      %p95 = scmp.ne.s32.totalorder %s80, %s94
      %p96 = scmp.eq.s32.totalorder %s28, 0
      %p97 = por %p95, %p96
      %s99 = sadd.s32 %s98, 1
      %p102 = scmp.eq.s32.totalorder %s22, 1
      %p103 = scmp.ne.s32.totalorder %s98, %s100
      %p104 = scmp.eq.s32.totalorder %s22, 0
      %p105 = por %p103, %p104
      %p106 = scmp.ne.s32.totalorder %s98, %s100
      %p107 = scmp.eq.s32.totalorder %s27, 1
      %p108 = por %p106, %p107
      %p109 = scmp.ne.s32.totalorder %s100, %s101
      %p110 = scmp.eq.s32.totalorder %s27, 0
      %p111 = por %p109, %p110
      %p112 = scmp.ne.s32.totalorder %s100, %s101
      %p113 = scmp.eq.s32.totalorder %s28, 1
      %p114 = por %p112, %p113
      %p116 = scmp.ne.s32.totalorder %s101, %s115
      %p117 = scmp.eq.s32.totalorder %s28, 0
      %p118 = por %p116, %p117
      %s119 = ssub.s32 %s22, %s29
      %p120 = scmp.eq.s32.totalorder %s119, 0
      %s122 = sadd.s32 %s121, 1
      %s123 = scalar_select %p120, %s121, %s122
      %p126 = pneg %p120
      %p127 = scmp.eq.s32.totalorder %s22, 1
      %p128 = por %p126, %p127
      %p129 = scmp.ne.s32.totalorder %s121, %s124
      %p130 = scmp.eq.s32.totalorder %s22, 0
      %p131 = por %p129, %p130
      %p132 = scmp.ne.s32.totalorder %s121, %s124
      %p133 = scmp.eq.s32.totalorder %s27, 1
      %p134 = por %p132, %p133
      %p135 = scmp.ne.s32.totalorder %s124, %s125
      %p136 = scmp.eq.s32.totalorder %s27, 0
      %p137 = por %p135, %p136
      %p138 = scmp.ne.s32.totalorder %s124, %s125
      %p139 = scmp.eq.s32.totalorder %s28, 1
      %p140 = por %p138, %p139
      %p142 = scmp.ne.s32.totalorder %s125, %s141
      %p143 = scmp.eq.s32.totalorder %s28, 0
      %p144 = por %p142, %p143
      %s145 = ssub.s32 %s22, %s29
      %p146 = scmp.eq.s32.totalorder %s145, 0
      %s148 = sadd.s32 %s147, 1
      %s149 = scalar_select %p146, %s147, %s148
      %p152 = pneg %p146
      %p153 = scmp.eq.s32.totalorder %s22, 1
      %p154 = por %p152, %p153
      %p155 = scmp.ne.s32.totalorder %s147, %s150
      %p156 = scmp.eq.s32.totalorder %s22, 0
      %p157 = por %p155, %p156
      %p158 = scmp.ne.s32.totalorder %s147, %s150
      %p159 = scmp.eq.s32.totalorder %s27, 1
      %p160 = por %p158, %p159
      %p161 = scmp.ne.s32.totalorder %s150, %s151
      %p162 = scmp.eq.s32.totalorder %s27, 0
      %p163 = por %p161, %p162
      %p164 = scmp.ne.s32.totalorder %s150, %s151
      %p165 = scmp.eq.s32.totalorder %s28, 1
      %p166 = por %p164, %p165
      %p168 = scmp.ne.s32.totalorder %s151, %s167
      %p169 = scmp.eq.s32.totalorder %s28, 0
      %p170 = por %p168, %p169
      %p171 = scmp.le.s32.totalorder 1, %s22
      %p172 = scmp.lt.s32.totalorder %s22, 3
      %p173 = pnand %p171, %p172
      %p174 = pneg %p173
      // Predicated region
      $region9: #{tpu_custom_call.1} parent=5 // pred_check
        _
      $region10: #{tpu_custom_call.1} parent=5 // pred_check_branch
        %176 = sbr.rel (%p173) target = $region12
      $region11: #{tpu_custom_call.1} parent=5 // pred_region
        %s177 = ssub.s32 %s22, 1
        // Predicated region
        $region13: #{tpu_custom_call.1} parent=11 // pred_check
          %p178 = pneg %p69
        $region14: #{tpu_custom_call.1} parent=11 // pred_check_branch
          %180 = sbr.rel (%p178) target = $region16
        $region15: #{tpu_custom_call.1} parent=11 // pred_region
          %s182 = ssub.s32 512, 512
          %183 = vsyncadd [#allocation8], %s182
          %s184 = sshll.u32 [#allocation7], 4
          %s185 = int_to_ptr.vmem [resolvable:$true] %s184
          %190 = dma.hbm_to_vmem [thread:$0]  %s1, 512, %s185, [#allocation8], 128, 128, 8
        $region16: #{tpu_custom_call.1} parent=11 // pred_fallthru
          _
        // Predicated region
        $region17: #{tpu_custom_call.1} parent=11 // pred_check
          %p191 = pneg %p90
        $region18: #{tpu_custom_call.1} parent=11 // pred_check_branch
          %193 = sbr.rel (%p191) target = $region20
        $region19: #{tpu_custom_call.1} parent=11 // pred_region
          %s195 = ssub.s32 512, 512
          %196 = vsyncadd [#allocation8], %s195
          %s197 = sshll.u32 [#allocation9], 4
          %s198 = int_to_ptr.vmem [resolvable:$true] %s197
          %203 = dma.hbm_to_vmem [thread:$0]  %s2, 512, %s198, [#allocation8], 64, 64, 4
        $region20: #{tpu_custom_call.1} parent=11 // pred_fallthru
          _
        // Predicated region
        $region21: #{tpu_custom_call.1} parent=11 // pred_check
          %p204 = pneg %p111
        $region22: #{tpu_custom_call.1} parent=11 // pred_check_branch
          %206 = sbr.rel (%p204) target = $region24
        $region23: #{tpu_custom_call.1} parent=11 // pred_region
          _
        $region24: #{tpu_custom_call.1} parent=11 // pred_fallthru
          _
      $region12: #{tpu_custom_call.1} parent=5 // pred_fallthru
        _
      %p207 = scmp.lt.s32.totalorder %s22, 2
      // Predicated region
      $region25: #{tpu_custom_call.1} parent=5 // pred_check
        %p208 = pneg %p207
      $region26: #{tpu_custom_call.1} parent=5 // pred_check_branch
        %210 = sbr.rel (%p208) target = $region28
      $region27: #{tpu_custom_call.1} parent=5 // pred_region
        // Predicated region
        $region29: #{tpu_custom_call.1} parent=27 // pred_check
          %p211 = pneg %p42
        $region30: #{tpu_custom_call.1} parent=27 // pred_check_branch
          %213 = sbr.rel (%p211) target = $region32
        $region31: #{tpu_custom_call.1} parent=27 // pred_region
          %s214 = sand.u32 %s32, 1
          %s215 = scalar_lea.sflag [#allocation5], %s214
          %s216 = sand.u32 %s32, 1
          %s217 = smul.addr %s216, 8
          %s218 = scalar_lea.vmem [#allocation4], %s217
          %s220 = ssub.s32 128, 128
          %221 = vsyncadd %s215, %s220
          %s222 = smul.addr %s22, 128
          %s223 = scalar_lea.hbm %s0, %s222
          %s225 = sshll.u32 %s218, 4
          %s226 = int_to_ptr.vmem [resolvable:$true] %s225
          %228 = dma.hbm_to_vmem [thread:$0]  %s223, 128, %s226, %s215
        $region32: #{tpu_custom_call.1} parent=27 // pred_fallthru
          _
      $region28: #{tpu_custom_call.1} parent=5 // pred_fallthru
        _
      %p229 = scmp.le.s32.totalorder 1, %s22
      %p230 = scmp.lt.s32.totalorder %s22, 3
      %p231 = pnand %p229, %p230
      %p232 = pneg %p231
      // Predicated region
      $region33: #{tpu_custom_call.1} parent=5 // pred_check
        _
      $region34: #{tpu_custom_call.1} parent=5 // pred_check_branch
        %234 = sbr.rel (%p231) target = $region36
      $region35: #{tpu_custom_call.1} parent=5 // pred_region
        %s235 = ssub.s32 %s22, 1
        %s236 = sand.u32 %s35, 1
        %s237 = scalar_lea.sflag [#allocation5], %s236
        %s238 = sand.u32 %s35, 1
        %s239 = smul.addr %s238, 8
        %s240 = scalar_lea.vmem [#allocation4], %s239
        // Predicated region
        $region37: #{tpu_custom_call.1} parent=35 // pred_check
          %p241 = pneg %p48
        $region38: #{tpu_custom_call.1} parent=35 // pred_check_branch
          %243 = sbr.rel (%p241) target = $region40
        $region39: #{tpu_custom_call.1} parent=35 // pred_region
          %244 = dma.done %s237, 128
        $region40: #{tpu_custom_call.1} parent=35 // pred_fallthru
          _
        // Predicated region
        $region41: #{tpu_custom_call.1} parent=35 // pred_check
          %p245 = pneg %p69
        $region42: #{tpu_custom_call.1} parent=35 // pred_check_branch
          %247 = sbr.rel (%p245) target = $region44
        $region43: #{tpu_custom_call.1} parent=35 // pred_region
          %248 = dma.done [#allocation8], 512
        $region44: #{tpu_custom_call.1} parent=35 // pred_fallthru
          _
        // Predicated region
        $region45: #{tpu_custom_call.1} parent=35 // pred_check
          %p249 = pneg %p90
        $region46: #{tpu_custom_call.1} parent=35 // pred_check_branch
          %251 = sbr.rel (%p249) target = $region48
        $region47: #{tpu_custom_call.1} parent=35 // pred_region
          %252 = dma.done [#allocation8], 512
        $region48: #{tpu_custom_call.1} parent=35 // pred_fallthru
          _
        %s253 = sand.u32 %s35, 1
        %s254 = scalar_lea.sflag [#allocation5], %s253
        %s255 = sand.u32 %s35, 1
        %s256 = smul.addr %s255, 8
        %s257 = scalar_lea.vmem [#allocation4], %s256
        %p258 = pneg %p48
        %p259 = pneg %p45
        %p260 = pneg %p69
        %p261 = pneg %p66
        %p262 = pneg %p90
        %p263 = pneg %p87
        %p264 = pneg %p111
        %p265 = pneg %p108
        %p266 = pneg %p137
        %p267 = pneg %p134
        %s268 = sand.u32 %s124, 1
        %s269 = scalar_lea.sflag [#allocation6], %s268
        %s270 = sand.u32 %s124, 1
        %s271 = smul.addr %s270, 8
        %s272 = scalar_lea.vmem [#allocation10], %s271
        %p273 = pneg %p163
        %p274 = pneg %p160
        %s275 = sand.u32 %s150, 1
        %s276 = scalar_lea.sflag [#allocation12], %s275
        %s277 = sand.u32 %s150, 1
        %s278 = smul.addr %s277, 64
        %s279 = scalar_lea.vmem [#allocation11], %s278
        %v280 = vld [vmem:[%s240] sm:$0xff]
        %v281 = vld [vmem:[#allocation7] sm:$0xff]
        %v282 = vld [vmem:[#allocation7 + $0x8] sm:$0xff]
        %v283 = vld [vmem:[#allocation7 + $0x10] sm:$0xff]
        %v284 = vld [vmem:[#allocation7 + $0x18] sm:$0xff]
        %vm285 = vcmask 261120
        %v287 = vsel %vm285, %v280, 0
        %289 = vmatprep.subr.mxu0 0.0
        %290 = vmatpush1.msra.mxu0 %v281
        %291 = vmatprep.subr.mxu0 0.0
        %292 = vmatpush1.msra.mxu0 %v282
        %293 = vmatprep.subr.mxu0 0.0
        %294 = vmatpush1.msra.mxu0 %v283
        %295 = vmatprep.subr.mxu0 0.0
        %296 = vmatpush1.msra.mxu0 %v284
        %297 = vmatprep.subr.mxu0 0.0
        %298 = vmatpush1.msra.mxu0 0.0
        %299 = vmatprep.subr.mxu0 0.0
        %300 = vmatpush1.msra.mxu0 0.0
        %301 = vmatprep.subr.mxu0 0.0
        %302 = vmatpush1.msra.mxu0 0.0
        %303 = vmatprep.subr.mxu0 0.0
        %304 = vmatpush1.msra.mxu0 0.0
        %305 = vmatprep.subr.mxu0 0.0
        %306 = vmatpush1.msra.mxu0 0.0
        %307 = vmatprep.subr.mxu0 0.0
        %308 = vmatpush1.msra.mxu0 0.0
        %309 = vmatprep.subr.mxu0 0.0
        %310 = vmatpush1.msra.mxu0 0.0
        %311 = vmatprep.subr.mxu0 0.0
        %312 = vmatpush1.msra.mxu0 0.0
        %313 = vmatprep.subr.mxu0 0.0
        %314 = vmatpush1.msra.mxu0 0.0
        %315 = vmatprep.subr.mxu0 0.0
        %316 = vmatpush1.msra.mxu0 0.0
        %317 = vmatprep.subr.mxu0 0.0
        %318 = vmatpush1.msra.mxu0 0.0
        %319 = vmatprep.subr.mxu0 0.0
        %320 = vmatpush1.msra.mxu0 0.0
        %321 = vmatprep.subr.mxu0 0.0
        %322 = vmatpush1.msra.mxu0 0.0
        %323 = vmatprep.subr.mxu0 0.0
        %324 = vmatpush1.msra.mxu0 0.0
        %325 = vmatprep.subr.mxu0 0.0
        %326 = vmatpush1.msra.mxu0 0.0
        %327 = vmatprep.subr.mxu0 0.0
        %328 = vmatpush1.msra.mxu0 0.0
        %329 = vmatprep.subr.mxu0 0.0
        %330 = vmatpush1.msra.mxu0 0.0
        %331 = vmatprep.subr.mxu0 0.0
        %332 = vmatpush1.msra.mxu0 0.0
        %333 = vmatprep.subr.mxu0 0.0
        %334 = vmatpush1.msra.mxu0 0.0
        %335 = vmatprep.subr.mxu0 0.0
        %336 = vmatpush1.msra.mxu0 0.0
        %337 = vmatprep.subr.mxu0 0.0
        %338 = vmatpush1.msra.mxu0 0.0
        %339 = vmatprep.subr.mxu0 0.0
        %340 = vmatpush1.msra.mxu0 0.0
        %341 = vmatprep.subr.mxu0 0.0
        %342 = vmatpush1.msra.mxu0 0.0
        %343 = vmatprep.subr.mxu0 0.0
        %344 = vmatpush1.msra.mxu0 0.0
        %345 = vmatprep.subr.mxu0 0.0
        %346 = vmatpush1.msra.mxu0 0.0
        %347 = vmatprep.subr.mxu0 0.0
        %348 = vmatpush1.msra.mxu0 0.0
        %349 = vmatprep.subr.mxu0 0.0
        %350 = vmatpush1.msra.mxu0 0.0
        %351 = vmatprep.subr.mxu0 0.0
        %352 = vmatpush1.msra.mxu0 0.0
        %353 = vmatprep.mubr.f32.mxu0 0.0
        %354 = vmatmul.mubr.f32.gmra.mrb[0].mxu0 %v287
        %v355 = vpop.f32.mrb[0].mxu0
        %v356 = vadd.f32 0.0, %v355
        %v357 = vpop.f32.mrb[0].mxu0
        %358 = vdwg.mxu0
        %vm359 = vcmask 785408
        %360 = vst.msk [vmem:[#allocation2] sm:$0xff] %vm359, %v356
        %v361 = vld [vmem:[#allocation2] sm:$0xff]
        %363 = vrot.lane.b32.xlu0 %v361, 96
        %v364 = vpop.permute.xlu0 %363
        %vm365 = vcmask 31744
        %v366 = vsel %vm365, %v361, 0
        %v368 = vsel %vm365, %v364, 0
        %370 = vmatprep.subr.mxu0 0.0
        %371 = vmatpush1.xpose.msra.mxu0 %v368
        %372 = vmatprep.subr.mxu0 0.0
        %373 = vmatpush1.xpose.msra.mxu0 0.0
        %374 = vmatprep.subr.mxu0 0.0
        %375 = vmatpush1.xpose.msra.mxu0 0.0
        %376 = vmatprep.subr.mxu0 0.0
        %377 = vmatpush1.xpose.msra.mxu0 0.0
        %378 = vmatprep.subr.mxu0 0.0
        %379 = vmatpush1.xpose.msra.mxu0 0.0
        %380 = vmatprep.subr.mxu0 0.0
        %381 = vmatpush1.xpose.msra.mxu0 0.0
        %382 = vmatprep.subr.mxu0 0.0
        %383 = vmatpush1.xpose.msra.mxu0 0.0
        %384 = vmatprep.subr.mxu0 0.0
        %385 = vmatpush1.xpose.msra.mxu0 0.0
        %386 = vmatprep.subr.mxu0 0.0
        %387 = vmatpush1.xpose.msra.mxu0 0.0
        %388 = vmatprep.subr.mxu0 0.0
        %389 = vmatpush1.xpose.msra.mxu0 0.0
        %390 = vmatprep.subr.mxu0 0.0
        %391 = vmatpush1.xpose.msra.mxu0 0.0
        %392 = vmatprep.subr.mxu0 0.0
        %393 = vmatpush1.xpose.msra.mxu0 0.0
        %394 = vmatprep.subr.mxu0 0.0
        %395 = vmatpush1.xpose.msra.mxu0 0.0
        %396 = vmatprep.subr.mxu0 0.0
        %397 = vmatpush1.xpose.msra.mxu0 0.0
        %398 = vmatprep.subr.mxu0 0.0
        %399 = vmatpush1.xpose.msra.mxu0 0.0
        %400 = vmatprep.subr.mxu0 0.0
        %401 = vmatpush1.xpose.msra.mxu0 0.0
        %402 = vmatprep.subr.mxu0 0.0
        %403 = vmatpush1.xpose.msra.mxu0 0.0
        %404 = vmatprep.subr.mxu0 0.0
        %405 = vmatpush1.xpose.msra.mxu0 0.0
        %406 = vmatprep.subr.mxu0 0.0
        %407 = vmatpush1.xpose.msra.mxu0 0.0
        %408 = vmatprep.subr.mxu0 0.0
        %409 = vmatpush1.xpose.msra.mxu0 0.0
        %410 = vmatprep.subr.mxu0 0.0
        %411 = vmatpush1.xpose.msra.mxu0 0.0
        %412 = vmatprep.subr.mxu0 0.0
        %413 = vmatpush1.xpose.msra.mxu0 0.0
        %414 = vmatprep.subr.mxu0 0.0
        %415 = vmatpush1.xpose.msra.mxu0 0.0
        %416 = vmatprep.subr.mxu0 0.0
        %417 = vmatpush1.xpose.msra.mxu0 0.0
        %418 = vmatprep.subr.mxu0 0.0
        %419 = vmatpush1.xpose.msra.mxu0 0.0
        %420 = vmatprep.subr.mxu0 0.0
        %421 = vmatpush1.xpose.msra.mxu0 0.0
        %422 = vmatprep.subr.mxu0 0.0
        %423 = vmatpush1.xpose.msra.mxu0 0.0
        %424 = vmatprep.subr.mxu0 0.0
        %425 = vmatpush1.xpose.msra.mxu0 0.0
        %426 = vmatprep.subr.mxu0 0.0
        %427 = vmatpush1.xpose.msra.mxu0 0.0
        %428 = vmatprep.subr.mxu0 0.0
        %429 = vmatpush1.xpose.msra.mxu0 0.0
        %430 = vmatprep.subr.mxu0 0.0
        %431 = vmatpush1.xpose.msra.mxu0 0.0
        %432 = vmatprep.subr.mxu0 0.0
        %433 = vmatpush1.xpose.msra.mxu0 0.0
        %434 = vmatprep.mubr.f32.mxu0 0.0
        %435 = vmatmul.mubr.f32.gmra.mrb[0].mxu0 %v366
        %v436 = vpop.f32.mrb[0].mxu0
        %v437 = vadd.f32 0.0, %v436
        %v438 = vpop.f32.mrb[0].mxu0
        %439 = vdwg.mxu0
        %vm440 = vcmask 64512
        %v441 = vsel %vm440, %v437, -inf
        %442 = vmax.xlane.f32.xlu0 %v441
        %v443 = vpop.xlane.xlu0 %442
        %v444 = vsub.f32 %v437, %v443
        %v445 = vmul.f32 %v444, 1.442695
        %v446 = vpow.pop %v445
        %v447 = vsel %vm440, %v446, 0.0
        %448 = vadd.xlane.f32.xlu0 %v447
        %v449 = vpop.xlane.xlu0 %448
        %v450 = vrcp.pop %v449
        %v451 = vmul.f32 %v446, %v450
        %452 = vst.msk [vmem:[%s279] sm:$0xff] %vm440, %v451
        %453 = vrot.lane.b32.xlu0 %v361, 64
        %v454 = vpop.permute.xlu0 %453
        %v457 = vsel %vm440, %v451, 0
        %459 = vmatprep.subr.mxu0 0.0
        %460 = vmatpush1.msra.mxu0 %v454
        %461 = vmatprep.subr.mxu0 0.0
        %462 = vmatpush1.msra.mxu0 0.0
        %463 = vmatprep.subr.mxu0 0.0
        %464 = vmatpush1.msra.mxu0 0.0
        %465 = vmatprep.subr.mxu0 0.0
        %466 = vmatpush1.msra.mxu0 0.0
        %467 = vmatprep.subr.mxu0 0.0
        %468 = vmatpush1.msra.mxu0 0.0
        %469 = vmatprep.subr.mxu0 0.0
        %470 = vmatpush1.msra.mxu0 0.0
        %471 = vmatprep.subr.mxu0 0.0
        %472 = vmatpush1.msra.mxu0 0.0
        %473 = vmatprep.subr.mxu0 0.0
        %474 = vmatpush1.msra.mxu0 0.0
        %475 = vmatprep.subr.mxu0 0.0
        %476 = vmatpush1.msra.mxu0 0.0
        %477 = vmatprep.subr.mxu0 0.0
        %478 = vmatpush1.msra.mxu0 0.0
        %479 = vmatprep.subr.mxu0 0.0
        %480 = vmatpush1.msra.mxu0 0.0
        %481 = vmatprep.subr.mxu0 0.0
        %482 = vmatpush1.msra.mxu0 0.0
        %483 = vmatprep.subr.mxu0 0.0
        %484 = vmatpush1.msra.mxu0 0.0
        %485 = vmatprep.subr.mxu0 0.0
        %486 = vmatpush1.msra.mxu0 0.0
        %487 = vmatprep.subr.mxu0 0.0
        %488 = vmatpush1.msra.mxu0 0.0
        %489 = vmatprep.subr.mxu0 0.0
        %490 = vmatpush1.msra.mxu0 0.0
        %491 = vmatprep.subr.mxu0 0.0
        %492 = vmatpush1.msra.mxu0 0.0
        %493 = vmatprep.subr.mxu0 0.0
        %494 = vmatpush1.msra.mxu0 0.0
        %495 = vmatprep.subr.mxu0 0.0
        %496 = vmatpush1.msra.mxu0 0.0
        %497 = vmatprep.subr.mxu0 0.0
        %498 = vmatpush1.msra.mxu0 0.0
        %499 = vmatprep.subr.mxu0 0.0
        %500 = vmatpush1.msra.mxu0 0.0
        %501 = vmatprep.subr.mxu0 0.0
        %502 = vmatpush1.msra.mxu0 0.0
        %503 = vmatprep.subr.mxu0 0.0
        %504 = vmatpush1.msra.mxu0 0.0
        %505 = vmatprep.subr.mxu0 0.0
        %506 = vmatpush1.msra.mxu0 0.0
        %507 = vmatprep.subr.mxu0 0.0
        %508 = vmatpush1.msra.mxu0 0.0
        %509 = vmatprep.subr.mxu0 0.0
        %510 = vmatpush1.msra.mxu0 0.0
        %511 = vmatprep.subr.mxu0 0.0
        %512 = vmatpush1.msra.mxu0 0.0
        %513 = vmatprep.subr.mxu0 0.0
        %514 = vmatpush1.msra.mxu0 0.0
        %515 = vmatprep.subr.mxu0 0.0
        %516 = vmatpush1.msra.mxu0 0.0
        %517 = vmatprep.subr.mxu0 0.0
        %518 = vmatpush1.msra.mxu0 0.0
        %519 = vmatprep.subr.mxu0 0.0
        %520 = vmatpush1.msra.mxu0 0.0
        %521 = vmatprep.subr.mxu0 0.0
        %522 = vmatpush1.msra.mxu0 0.0
        %523 = vmatprep.mubr.f32.mxu0 0.0
        %524 = vmatmul.mubr.f32.gmra.mrb[0].mxu0 %v457
        %v525 = vpop.f32.mrb[0].mxu0
        %v526 = vadd.f32 0.0, %v525
        %v527 = vpop.f32.mrb[0].mxu0
        %528 = vdwg.mxu0
        %v529 = vld [vmem:[#allocation9] sm:$0xf]
        %v531 = vsel %vm365, %v526, 0
        %vm533 = vcmask 1043456
        %v535 = vsel %vm533, %v529, 0
        %537 = vmatprep.subr.mxu0 0.0
        %538 = vmatpush1.msra.mxu0 %v535
        %539 = vmatprep.subr.mxu0 0.0
        %540 = vmatpush1.msra.mxu0 0.0
        %541 = vmatprep.subr.mxu0 0.0
        %542 = vmatpush1.msra.mxu0 0.0
        %543 = vmatprep.subr.mxu0 0.0
        %544 = vmatpush1.msra.mxu0 0.0
        %545 = vmatprep.subr.mxu0 0.0
        %546 = vmatpush1.msra.mxu0 0.0
        %547 = vmatprep.subr.mxu0 0.0
        %548 = vmatpush1.msra.mxu0 0.0
        %549 = vmatprep.subr.mxu0 0.0
        %550 = vmatpush1.msra.mxu0 0.0
        %551 = vmatprep.subr.mxu0 0.0
        %552 = vmatpush1.msra.mxu0 0.0
        %553 = vmatprep.subr.mxu0 0.0
        %554 = vmatpush1.msra.mxu0 0.0
        %555 = vmatprep.subr.mxu0 0.0
        %556 = vmatpush1.msra.mxu0 0.0
        %557 = vmatprep.subr.mxu0 0.0
        %558 = vmatpush1.msra.mxu0 0.0
        %559 = vmatprep.subr.mxu0 0.0
        %560 = vmatpush1.msra.mxu0 0.0
        %561 = vmatprep.subr.mxu0 0.0
        %562 = vmatpush1.msra.mxu0 0.0
        %563 = vmatprep.subr.mxu0 0.0
        %564 = vmatpush1.msra.mxu0 0.0
        %565 = vmatprep.subr.mxu0 0.0
        %566 = vmatpush1.msra.mxu0 0.0
        %567 = vmatprep.subr.mxu0 0.0
        %568 = vmatpush1.msra.mxu0 0.0
        %569 = vmatprep.subr.mxu0 0.0
        %570 = vmatpush1.msra.mxu0 0.0
        %571 = vmatprep.subr.mxu0 0.0
        %572 = vmatpush1.msra.mxu0 0.0
        %573 = vmatprep.subr.mxu0 0.0
        %574 = vmatpush1.msra.mxu0 0.0
        %575 = vmatprep.subr.mxu0 0.0
        %576 = vmatpush1.msra.mxu0 0.0
        %577 = vmatprep.subr.mxu0 0.0
        %578 = vmatpush1.msra.mxu0 0.0
        %579 = vmatprep.subr.mxu0 0.0
        %580 = vmatpush1.msra.mxu0 0.0
        %581 = vmatprep.subr.mxu0 0.0
        %582 = vmatpush1.msra.mxu0 0.0
        %583 = vmatprep.subr.mxu0 0.0
        %584 = vmatpush1.msra.mxu0 0.0
        %585 = vmatprep.subr.mxu0 0.0
        %586 = vmatpush1.msra.mxu0 0.0
        %587 = vmatprep.subr.mxu0 0.0
        %588 = vmatpush1.msra.mxu0 0.0
        %589 = vmatprep.subr.mxu0 0.0
        %590 = vmatpush1.msra.mxu0 0.0
        %591 = vmatprep.subr.mxu0 0.0
        %592 = vmatpush1.msra.mxu0 0.0
        %593 = vmatprep.subr.mxu0 0.0
        %594 = vmatpush1.msra.mxu0 0.0
        %595 = vmatprep.subr.mxu0 0.0
        %596 = vmatpush1.msra.mxu0 0.0
        %597 = vmatprep.subr.mxu0 0.0
        %598 = vmatpush1.msra.mxu0 0.0
        %599 = vmatprep.subr.mxu0 0.0
        %600 = vmatpush1.msra.mxu0 0.0
        %601 = vmatprep.mubr.f32.mxu0 0.0
        %602 = vmatmul.mubr.f32.gmra.mrb[0].mxu0 %v531
        %v603 = vpop.f32.mrb[0].mxu0
        %v604 = vadd.f32 0.0, %v603
        %v605 = vpop.f32.mrb[0].mxu0
        %606 = vdwg.mxu0
        %607 = vst.msk [vmem:[#allocation3] sm:$0xff] %vm285, %v604
        %v608 = vld [vmem:[#allocation2] sm:$0xff]
        %610 = vrot.lane.b32.xlu0 %v608, 124
        %v611 = vpop.permute.xlu0 %610
        %612 = vrot.lane.b32.xlu0 %v608, 92
        %v613 = vpop.permute.xlu0 %612
        %v614 = vsel %vm365, %v611, 0
        %v616 = vsel %vm365, %v613, 0
        %618 = vmatprep.subr.mxu0 0.0
        %619 = vmatpush1.xpose.msra.mxu0 %v616
        %620 = vmatprep.subr.mxu0 0.0
        %621 = vmatpush1.xpose.msra.mxu0 0.0
        %622 = vmatprep.subr.mxu0 0.0
        %623 = vmatpush1.xpose.msra.mxu0 0.0
        %624 = vmatprep.subr.mxu0 0.0
        %625 = vmatpush1.xpose.msra.mxu0 0.0
        %626 = vmatprep.subr.mxu0 0.0
        %627 = vmatpush1.xpose.msra.mxu0 0.0
        %628 = vmatprep.subr.mxu0 0.0
        %629 = vmatpush1.xpose.msra.mxu0 0.0
        %630 = vmatprep.subr.mxu0 0.0
        %631 = vmatpush1.xpose.msra.mxu0 0.0
        %632 = vmatprep.subr.mxu0 0.0
        %633 = vmatpush1.xpose.msra.mxu0 0.0
        %634 = vmatprep.subr.mxu0 0.0
        %635 = vmatpush1.xpose.msra.mxu0 0.0
        %636 = vmatprep.subr.mxu0 0.0
        %637 = vmatpush1.xpose.msra.mxu0 0.0
        %638 = vmatprep.subr.mxu0 0.0
        %639 = vmatpush1.xpose.msra.mxu0 0.0
        %640 = vmatprep.subr.mxu0 0.0
        %641 = vmatpush1.xpose.msra.mxu0 0.0
        %642 = vmatprep.subr.mxu0 0.0
        %643 = vmatpush1.xpose.msra.mxu0 0.0
        %644 = vmatprep.subr.mxu0 0.0
        %645 = vmatpush1.xpose.msra.mxu0 0.0
        %646 = vmatprep.subr.mxu0 0.0
        %647 = vmatpush1.xpose.msra.mxu0 0.0
        %648 = vmatprep.subr.mxu0 0.0
        %649 = vmatpush1.xpose.msra.mxu0 0.0
        %650 = vmatprep.subr.mxu0 0.0
        %651 = vmatpush1.xpose.msra.mxu0 0.0
        %652 = vmatprep.subr.mxu0 0.0
        %653 = vmatpush1.xpose.msra.mxu0 0.0
        %654 = vmatprep.subr.mxu0 0.0
        %655 = vmatpush1.xpose.msra.mxu0 0.0
        %656 = vmatprep.subr.mxu0 0.0
        %657 = vmatpush1.xpose.msra.mxu0 0.0
        %658 = vmatprep.subr.mxu0 0.0
        %659 = vmatpush1.xpose.msra.mxu0 0.0
        %660 = vmatprep.subr.mxu0 0.0
        %661 = vmatpush1.xpose.msra.mxu0 0.0
        %662 = vmatprep.subr.mxu0 0.0
        %663 = vmatpush1.xpose.msra.mxu0 0.0
        %664 = vmatprep.subr.mxu0 0.0
        %665 = vmatpush1.xpose.msra.mxu0 0.0
        %666 = vmatprep.subr.mxu0 0.0
        %667 = vmatpush1.xpose.msra.mxu0 0.0
        %668 = vmatprep.subr.mxu0 0.0
        %669 = vmatpush1.xpose.msra.mxu0 0.0
        %670 = vmatprep.subr.mxu0 0.0
        %671 = vmatpush1.xpose.msra.mxu0 0.0
        %672 = vmatprep.subr.mxu0 0.0
        %673 = vmatpush1.xpose.msra.mxu0 0.0
        %674 = vmatprep.subr.mxu0 0.0
        %675 = vmatpush1.xpose.msra.mxu0 0.0
        %676 = vmatprep.subr.mxu0 0.0
        %677 = vmatpush1.xpose.msra.mxu0 0.0
        %678 = vmatprep.subr.mxu0 0.0
        %679 = vmatpush1.xpose.msra.mxu0 0.0
        %680 = vmatprep.subr.mxu0 0.0
        %681 = vmatpush1.xpose.msra.mxu0 0.0
        %682 = vmatprep.mubr.f32.mxu0 0.0
        %683 = vmatmul.mubr.f32.gmra.mrb[0].mxu0 %v614
        %v684 = vpop.f32.mrb[0].mxu0
        %v685 = vadd.f32 0.0, %v684
        %v686 = vpop.f32.mrb[0].mxu0
        %687 = vdwg.mxu0
        %v688 = vsel %vm440, %v685, -inf
        %689 = vmax.xlane.f32.xlu0 %v688
        %v690 = vpop.xlane.xlu0 %689
        %v691 = vsub.f32 %v685, %v690
        %v692 = vmul.f32 %v691, 1.442695
        %v693 = vpow.pop %v692
        %v694 = vsel %vm440, %v693, 0.0
        %695 = vadd.xlane.f32.xlu0 %v694
        %v696 = vpop.xlane.xlu0 %695
        %v697 = vrcp.pop %v696
        %v698 = vmul.f32 %v693, %v697
        %s699 = scalar_lea.vmem %s279, 8 [#allocation11]
        %700 = vst.msk [vmem:[%s699] sm:$0xff] %vm440, %v698
        %701 = vrot.lane.b32.xlu0 %v608, 60
        %v702 = vpop.permute.xlu0 %701
        %v705 = vsel %vm440, %v698, 0
        %707 = vmatprep.subr.mxu0 0.0
        %708 = vmatpush1.msra.mxu0 %v702
        %709 = vmatprep.subr.mxu0 0.0
        %710 = vmatpush1.msra.mxu0 0.0
        %711 = vmatprep.subr.mxu0 0.0
        %712 = vmatpush1.msra.mxu0 0.0
        %713 = vmatprep.subr.mxu0 0.0
        %714 = vmatpush1.msra.mxu0 0.0
        %715 = vmatprep.subr.mxu0 0.0
        %716 = vmatpush1.msra.mxu0 0.0
        %717 = vmatprep.subr.mxu0 0.0
        %718 = vmatpush1.msra.mxu0 0.0
        %719 = vmatprep.subr.mxu0 0.0
        %720 = vmatpush1.msra.mxu0 0.0
        %721 = vmatprep.subr.mxu0 0.0
        %722 = vmatpush1.msra.mxu0 0.0
        %723 = vmatprep.subr.mxu0 0.0
        %724 = vmatpush1.msra.mxu0 0.0
        %725 = vmatprep.subr.mxu0 0.0
        %726 = vmatpush1.msra.mxu0 0.0
        %727 = vmatprep.subr.mxu0 0.0
        %728 = vmatpush1.msra.mxu0 0.0
        %729 = vmatprep.subr.mxu0 0.0
        %730 = vmatpush1.msra.mxu0 0.0
        %731 = vmatprep.subr.mxu0 0.0
        %732 = vmatpush1.msra.mxu0 0.0
        %733 = vmatprep.subr.mxu0 0.0
        %734 = vmatpush1.msra.mxu0 0.0
        %735 = vmatprep.subr.mxu0 0.0
        %736 = vmatpush1.msra.mxu0 0.0
        %737 = vmatprep.subr.mxu0 0.0
        %738 = vmatpush1.msra.mxu0 0.0
        %739 = vmatprep.subr.mxu0 0.0
        %740 = vmatpush1.msra.mxu0 0.0
        %741 = vmatprep.subr.mxu0 0.0
        %742 = vmatpush1.msra.mxu0 0.0
        %743 = vmatprep.subr.mxu0 0.0
        %744 = vmatpush1.msra.mxu0 0.0
        %745 = vmatprep.subr.mxu0 0.0
        %746 = vmatpush1.msra.mxu0 0.0
        %747 = vmatprep.subr.mxu0 0.0
        %748 = vmatpush1.msra.mxu0 0.0
        %749 = vmatprep.subr.mxu0 0.0
        %750 = vmatpush1.msra.mxu0 0.0
        %751 = vmatprep.subr.mxu0 0.0
        %752 = vmatpush1.msra.mxu0 0.0
        %753 = vmatprep.subr.mxu0 0.0
        %754 = vmatpush1.msra.mxu0 0.0
        %755 = vmatprep.subr.mxu0 0.0
        %756 = vmatpush1.msra.mxu0 0.0
        %757 = vmatprep.subr.mxu0 0.0
        %758 = vmatpush1.msra.mxu0 0.0
        %759 = vmatprep.subr.mxu0 0.0
        %760 = vmatpush1.msra.mxu0 0.0
        %761 = vmatprep.subr.mxu0 0.0
        %762 = vmatpush1.msra.mxu0 0.0
        %763 = vmatprep.subr.mxu0 0.0
        %764 = vmatpush1.msra.mxu0 0.0
        %765 = vmatprep.subr.mxu0 0.0
        %766 = vmatpush1.msra.mxu0 0.0
        %767 = vmatprep.subr.mxu0 0.0
        %768 = vmatpush1.msra.mxu0 0.0
        %769 = vmatprep.subr.mxu0 0.0
        %770 = vmatpush1.msra.mxu0 0.0
        %771 = vmatprep.mubr.f32.mxu0 0.0
        %772 = vmatmul.mubr.f32.gmra.mrb[0].mxu0 %v705
        %v773 = vpop.f32.mrb[0].mxu0
        %v774 = vadd.f32 0.0, %v773
        %v775 = vpop.f32.mrb[0].mxu0
        %776 = vdwg.mxu0
        %s777 = scalar_lea.vmem [#allocation9], 4
        %v778 = vld [vmem:[%s777] sm:$0xf]
        %v780 = vsel %vm365, %v774, 0
        %v783 = vsel %vm533, %v778, 0
        %785 = vmatprep.subr.mxu0 0.0
        %786 = vmatpush1.msra.mxu0 %v783
        %787 = vmatprep.subr.mxu0 0.0
        %788 = vmatpush1.msra.mxu0 0.0
        %789 = vmatprep.subr.mxu0 0.0
        %790 = vmatpush1.msra.mxu0 0.0
        %791 = vmatprep.subr.mxu0 0.0
        %792 = vmatpush1.msra.mxu0 0.0
        %793 = vmatprep.subr.mxu0 0.0
        %794 = vmatpush1.msra.mxu0 0.0
        %795 = vmatprep.subr.mxu0 0.0
        %796 = vmatpush1.msra.mxu0 0.0
        %797 = vmatprep.subr.mxu0 0.0
        %798 = vmatpush1.msra.mxu0 0.0
        %799 = vmatprep.subr.mxu0 0.0
        %800 = vmatpush1.msra.mxu0 0.0
        %801 = vmatprep.subr.mxu0 0.0
        %802 = vmatpush1.msra.mxu0 0.0
        %803 = vmatprep.subr.mxu0 0.0
        %804 = vmatpush1.msra.mxu0 0.0
        %805 = vmatprep.subr.mxu0 0.0
        %806 = vmatpush1.msra.mxu0 0.0
        %807 = vmatprep.subr.mxu0 0.0
        %808 = vmatpush1.msra.mxu0 0.0
        %809 = vmatprep.subr.mxu0 0.0
        %810 = vmatpush1.msra.mxu0 0.0
        %811 = vmatprep.subr.mxu0 0.0
        %812 = vmatpush1.msra.mxu0 0.0
        %813 = vmatprep.subr.mxu0 0.0
        %814 = vmatpush1.msra.mxu0 0.0
        %815 = vmatprep.subr.mxu0 0.0
        %816 = vmatpush1.msra.mxu0 0.0
        %817 = vmatprep.subr.mxu0 0.0
        %818 = vmatpush1.msra.mxu0 0.0
        %819 = vmatprep.subr.mxu0 0.0
        %820 = vmatpush1.msra.mxu0 0.0
        %821 = vmatprep.subr.mxu0 0.0
        %822 = vmatpush1.msra.mxu0 0.0
        %823 = vmatprep.subr.mxu0 0.0
        %824 = vmatpush1.msra.mxu0 0.0
        %825 = vmatprep.subr.mxu0 0.0
        %826 = vmatpush1.msra.mxu0 0.0
        %827 = vmatprep.subr.mxu0 0.0
        %828 = vmatpush1.msra.mxu0 0.0
        %829 = vmatprep.subr.mxu0 0.0
        %830 = vmatpush1.msra.mxu0 0.0
        %831 = vmatprep.subr.mxu0 0.0
        %832 = vmatpush1.msra.mxu0 0.0
        %833 = vmatprep.subr.mxu0 0.0
        %834 = vmatpush1.msra.mxu0 0.0
        %835 = vmatprep.subr.mxu0 0.0
        %836 = vmatpush1.msra.mxu0 0.0
        %837 = vmatprep.subr.mxu0 0.0
        %838 = vmatpush1.msra.mxu0 0.0
        %839 = vmatprep.subr.mxu0 0.0
        %840 = vmatpush1.msra.mxu0 0.0
        %841 = vmatprep.subr.mxu0 0.0
        %842 = vmatpush1.msra.mxu0 0.0
        %843 = vmatprep.subr.mxu0 0.0
        %844 = vmatpush1.msra.mxu0 0.0
        %845 = vmatprep.subr.mxu0 0.0
        %846 = vmatpush1.msra.mxu0 0.0
        %847 = vmatprep.subr.mxu0 0.0
        %848 = vmatpush1.msra.mxu0 0.0
        %849 = vmatprep.mubr.f32.mxu0 0.0
        %850 = vmatmul.mubr.f32.gmra.mrb[0].mxu0 %v780
        %v851 = vpop.f32.mrb[0].mxu0
        %v852 = vadd.f32 0.0, %v851
        %v853 = vpop.f32.mrb[0].mxu0
        %854 = vdwg.mxu0
        %v855 = vld [vmem:[#allocation3] sm:$0xff]
        %v856 = vadd.f32 %v855, %v852
        %857 = vst.msk [vmem:[#allocation3] sm:$0xff] %vm285, %v856
        %v858 = vld [vmem:[#allocation2] sm:$0xff]
        %860 = vrot.lane.b32.xlu0 %v858, 120
        %v861 = vpop.permute.xlu0 %860
        %862 = vrot.lane.b32.xlu0 %v858, 88
        %v863 = vpop.permute.xlu0 %862
        %v864 = vsel %vm365, %v861, 0
        %v866 = vsel %vm365, %v863, 0
        %868 = vmatprep.subr.mxu0 0.0
        %869 = vmatpush1.xpose.msra.mxu0 %v866
        %870 = vmatprep.subr.mxu0 0.0
        %871 = vmatpush1.xpose.msra.mxu0 0.0
        %872 = vmatprep.subr.mxu0 0.0
        %873 = vmatpush1.xpose.msra.mxu0 0.0
        %874 = vmatprep.subr.mxu0 0.0
        %875 = vmatpush1.xpose.msra.mxu0 0.0
        %876 = vmatprep.subr.mxu0 0.0
        %877 = vmatpush1.xpose.msra.mxu0 0.0
        %878 = vmatprep.subr.mxu0 0.0
        %879 = vmatpush1.xpose.msra.mxu0 0.0
        %880 = vmatprep.subr.mxu0 0.0
        %881 = vmatpush1.xpose.msra.mxu0 0.0
        %882 = vmatprep.subr.mxu0 0.0
        %883 = vmatpush1.xpose.msra.mxu0 0.0
        %884 = vmatprep.subr.mxu0 0.0
        %885 = vmatpush1.xpose.msra.mxu0 0.0
        %886 = vmatprep.subr.mxu0 0.0
        %887 = vmatpush1.xpose.msra.mxu0 0.0
        %888 = vmatprep.subr.mxu0 0.0
        %889 = vmatpush1.xpose.msra.mxu0 0.0
        %890 = vmatprep.subr.mxu0 0.0
        %891 = vmatpush1.xpose.msra.mxu0 0.0
        %892 = vmatprep.subr.mxu0 0.0
        %893 = vmatpush1.xpose.msra.mxu0 0.0
        %894 = vmatprep.subr.mxu0 0.0
        %895 = vmatpush1.xpose.msra.mxu0 0.0
        %896 = vmatprep.subr.mxu0 0.0
        %897 = vmatpush1.xpose.msra.mxu0 0.0
        %898 = vmatprep.subr.mxu0 0.0
        %899 = vmatpush1.xpose.msra.mxu0 0.0
        %900 = vmatprep.subr.mxu0 0.0
        %901 = vmatpush1.xpose.msra.mxu0 0.0
        %902 = vmatprep.subr.mxu0 0.0
        %903 = vmatpush1.xpose.msra.mxu0 0.0
        %904 = vmatprep.subr.mxu0 0.0
        %905 = vmatpush1.xpose.msra.mxu0 0.0
        %906 = vmatprep.subr.mxu0 0.0
        %907 = vmatpush1.xpose.msra.mxu0 0.0
        %908 = vmatprep.subr.mxu0 0.0
        %909 = vmatpush1.xpose.msra.mxu0 0.0
        %910 = vmatprep.subr.mxu0 0.0
        %911 = vmatpush1.xpose.msra.mxu0 0.0
        %912 = vmatprep.subr.mxu0 0.0
        %913 = vmatpush1.xpose.msra.mxu0 0.0
        %914 = vmatprep.subr.mxu0 0.0
        %915 = vmatpush1.xpose.msra.mxu0 0.0
        %916 = vmatprep.subr.mxu0 0.0
        %917 = vmatpush1.xpose.msra.mxu0 0.0
        %918 = vmatprep.subr.mxu0 0.0
        %919 = vmatpush1.xpose.msra.mxu0 0.0
        %920 = vmatprep.subr.mxu0 0.0
        %921 = vmatpush1.xpose.msra.mxu0 0.0
        %922 = vmatprep.subr.mxu0 0.0
        %923 = vmatpush1.xpose.msra.mxu0 0.0
        %924 = vmatprep.subr.mxu0 0.0
        %925 = vmatpush1.xpose.msra.mxu0 0.0
        %926 = vmatprep.subr.mxu0 0.0
        %927 = vmatpush1.xpose.msra.mxu0 0.0
        %928 = vmatprep.subr.mxu0 0.0
        %929 = vmatpush1.xpose.msra.mxu0 0.0
        %930 = vmatprep.subr.mxu0 0.0
        %931 = vmatpush1.xpose.msra.mxu0 0.0
        %932 = vmatprep.mubr.f32.mxu0 0.0
        %933 = vmatmul.mubr.f32.gmra.mrb[0].mxu0 %v864
        %v934 = vpop.f32.mrb[0].mxu0
        %v935 = vadd.f32 0.0, %v934
        %v936 = vpop.f32.mrb[0].mxu0
        %937 = vdwg.mxu0
        %v938 = vsel %vm440, %v935, -inf
        %939 = vmax.xlane.f32.xlu0 %v938
        %v940 = vpop.xlane.xlu0 %939
        %v941 = vsub.f32 %v935, %v940
        %v942 = vmul.f32 %v941, 1.442695
        %v943 = vpow.pop %v942
        %v944 = vsel %vm440, %v943, 0.0
        %945 = vadd.xlane.f32.xlu0 %v944
        %v946 = vpop.xlane.xlu0 %945
        %v947 = vrcp.pop %v946
        %v948 = vmul.f32 %v943, %v947
        %s949 = scalar_lea.vmem %s279, 16 [#allocation11]
        %950 = vst.msk [vmem:[%s949] sm:$0xff] %vm440, %v948
        %951 = vrot.lane.b32.xlu0 %v858, 56
        %v952 = vpop.permute.xlu0 %951
        %v955 = vsel %vm440, %v948, 0
        %957 = vmatprep.subr.mxu0 0.0
        %958 = vmatpush1.msra.mxu0 %v952
        %959 = vmatprep.subr.mxu0 0.0
        %960 = vmatpush1.msra.mxu0 0.0
        %961 = vmatprep.subr.mxu0 0.0
        %962 = vmatpush1.msra.mxu0 0.0
        %963 = vmatprep.subr.mxu0 0.0
        %964 = vmatpush1.msra.mxu0 0.0
        %965 = vmatprep.subr.mxu0 0.0
        %966 = vmatpush1.msra.mxu0 0.0
        %967 = vmatprep.subr.mxu0 0.0
        %968 = vmatpush1.msra.mxu0 0.0
        %969 = vmatprep.subr.mxu0 0.0
        %970 = vmatpush1.msra.mxu0 0.0
        %971 = vmatprep.subr.mxu0 0.0
        %972 = vmatpush1.msra.mxu0 0.0
        %973 = vmatprep.subr.mxu0 0.0
        %974 = vmatpush1.msra.mxu0 0.0
        %975 = vmatprep.subr.mxu0 0.0
        %976 = vmatpush1.msra.mxu0 0.0
        %977 = vmatprep.subr.mxu0 0.0
        %978 = vmatpush1.msra.mxu0 0.0
        %979 = vmatprep.subr.mxu0 0.0
        %980 = vmatpush1.msra.mxu0 0.0
        %981 = vmatprep.subr.mxu0 0.0
        %982 = vmatpush1.msra.mxu0 0.0
        %983 = vmatprep.subr.mxu0 0.0
        %984 = vmatpush1.msra.mxu0 0.0
        %985 = vmatprep.subr.mxu0 0.0
        %986 = vmatpush1.msra.mxu0 0.0
        %987 = vmatprep.subr.mxu0 0.0
        %988 = vmatpush1.msra.mxu0 0.0
        %989 = vmatprep.subr.mxu0 0.0
        %990 = vmatpush1.msra.mxu0 0.0
        %991 = vmatprep.subr.mxu0 0.0
        %992 = vmatpush1.msra.mxu0 0.0
        %993 = vmatprep.subr.mxu0 0.0
        %994 = vmatpush1.msra.mxu0 0.0
        %995 = vmatprep.subr.mxu0 0.0
        %996 = vmatpush1.msra.mxu0 0.0
        %997 = vmatprep.subr.mxu0 0.0
        %998 = vmatpush1.msra.mxu0 0.0
        %999 = vmatprep.subr.mxu0 0.0
        %1000 = vmatpush1.msra.mxu0 0.0
        %1001 = vmatprep.subr.mxu0 0.0
        %1002 = vmatpush1.msra.mxu0 0.0
        %1003 = vmatprep.subr.mxu0 0.0
        %1004 = vmatpush1.msra.mxu0 0.0
        %1005 = vmatprep.subr.mxu0 0.0
        %1006 = vmatpush1.msra.mxu0 0.0
        %1007 = vmatprep.subr.mxu0 0.0
        %1008 = vmatpush1.msra.mxu0 0.0
        %1009 = vmatprep.subr.mxu0 0.0
        %1010 = vmatpush1.msra.mxu0 0.0
        %1011 = vmatprep.subr.mxu0 0.0
        %1012 = vmatpush1.msra.mxu0 0.0
        %1013 = vmatprep.subr.mxu0 0.0
        %1014 = vmatpush1.msra.mxu0 0.0
        %1015 = vmatprep.subr.mxu0 0.0
        %1016 = vmatpush1.msra.mxu0 0.0
        %1017 = vmatprep.subr.mxu0 0.0
        %1018 = vmatpush1.msra.mxu0 0.0
        %1019 = vmatprep.subr.mxu0 0.0
        %1020 = vmatpush1.msra.mxu0 0.0
        %1021 = vmatprep.mubr.f32.mxu0 0.0
        %1022 = vmatmul.mubr.f32.gmra.mrb[0].mxu0 %v955
        %v1023 = vpop.f32.mrb[0].mxu0
        %v1024 = vadd.f32 0.0, %v1023
        %v1025 = vpop.f32.mrb[0].mxu0
        %1026 = vdwg.mxu0
        %s1027 = scalar_lea.vmem [#allocation9], 8
        %v1028 = vld [vmem:[%s1027] sm:$0xf]
        %v1030 = vsel %vm365, %v1024, 0
        %v1033 = vsel %vm533, %v1028, 0
        %1035 = vmatprep.subr.mxu0 0.0
        %1036 = vmatpush1.msra.mxu0 %v1033
        %1037 = vmatprep.subr.mxu0 0.0
        %1038 = vmatpush1.msra.mxu0 0.0
        %1039 = vmatprep.subr.mxu0 0.0
        %1040 = vmatpush1.msra.mxu0 0.0
        %1041 = vmatprep.subr.mxu0 0.0
        %1042 = vmatpush1.msra.mxu0 0.0
        %1043 = vmatprep.subr.mxu0 0.0
        %1044 = vmatpush1.msra.mxu0 0.0
        %1045 = vmatprep.subr.mxu0 0.0
        %1046 = vmatpush1.msra.mxu0 0.0
        %1047 = vmatprep.subr.mxu0 0.0
        %1048 = vmatpush1.msra.mxu0 0.0
        %1049 = vmatprep.subr.mxu0 0.0
        %1050 = vmatpush1.msra.mxu0 0.0
        %1051 = vmatprep.subr.mxu0 0.0
        %1052 = vmatpush1.msra.mxu0 0.0
        %1053 = vmatprep.subr.mxu0 0.0
        %1054 = vmatpush1.msra.mxu0 0.0
        %1055 = vmatprep.subr.mxu0 0.0
        %1056 = vmatpush1.msra.mxu0 0.0
        %1057 = vmatprep.subr.mxu0 0.0
        %1058 = vmatpush1.msra.mxu0 0.0
        %1059 = vmatprep.subr.mxu0 0.0
        %1060 = vmatpush1.msra.mxu0 0.0
        %1061 = vmatprep.subr.mxu0 0.0
        %1062 = vmatpush1.msra.mxu0 0.0
        %1063 = vmatprep.subr.mxu0 0.0
        %1064 = vmatpush1.msra.mxu0 0.0
        %1065 = vmatprep.subr.mxu0 0.0
        %1066 = vmatpush1.msra.mxu0 0.0
        %1067 = vmatprep.subr.mxu0 0.0
        %1068 = vmatpush1.msra.mxu0 0.0
        %1069 = vmatprep.subr.mxu0 0.0
        %1070 = vmatpush1.msra.mxu0 0.0
        %1071 = vmatprep.subr.mxu0 0.0
        %1072 = vmatpush1.msra.mxu0 0.0
        %1073 = vmatprep.subr.mxu0 0.0
        %1074 = vmatpush1.msra.mxu0 0.0
        %1075 = vmatprep.subr.mxu0 0.0
        %1076 = vmatpush1.msra.mxu0 0.0
        %1077 = vmatprep.subr.mxu0 0.0
        %1078 = vmatpush1.msra.mxu0 0.0
        %1079 = vmatprep.subr.mxu0 0.0
        %1080 = vmatpush1.msra.mxu0 0.0
        %1081 = vmatprep.subr.mxu0 0.0
        %1082 = vmatpush1.msra.mxu0 0.0
        %1083 = vmatprep.subr.mxu0 0.0
        %1084 = vmatpush1.msra.mxu0 0.0
        %1085 = vmatprep.subr.mxu0 0.0
        %1086 = vmatpush1.msra.mxu0 0.0
        %1087 = vmatprep.subr.mxu0 0.0
        %1088 = vmatpush1.msra.mxu0 0.0
        %1089 = vmatprep.subr.mxu0 0.0
        %1090 = vmatpush1.msra.mxu0 0.0
        %1091 = vmatprep.subr.mxu0 0.0
        %1092 = vmatpush1.msra.mxu0 0.0
        %1093 = vmatprep.subr.mxu0 0.0
        %1094 = vmatpush1.msra.mxu0 0.0
        %1095 = vmatprep.subr.mxu0 0.0
        %1096 = vmatpush1.msra.mxu0 0.0
        %1097 = vmatprep.subr.mxu0 0.0
        %1098 = vmatpush1.msra.mxu0 0.0
        %1099 = vmatprep.mubr.f32.mxu0 0.0
        %1100 = vmatmul.mubr.f32.gmra.mrb[0].mxu0 %v1030
        %v1101 = vpop.f32.mrb[0].mxu0
        %v1102 = vadd.f32 0.0, %v1101
        %v1103 = vpop.f32.mrb[0].mxu0
        %1104 = vdwg.mxu0
        %v1105 = vld [vmem:[#allocation3] sm:$0xff]
        %v1106 = vadd.f32 %v1105, %v1102
        %1107 = vst.msk [vmem:[#allocation3] sm:$0xff] %vm285, %v1106
        %v1108 = vld [vmem:[#allocation2] sm:$0xff]
        %1110 = vrot.lane.b32.xlu0 %v1108, 116
        %v1111 = vpop.permute.xlu0 %1110
        %1112 = vrot.lane.b32.xlu0 %v1108, 84
        %v1113 = vpop.permute.xlu0 %1112
        %v1114 = vsel %vm365, %v1111, 0
        %v1116 = vsel %vm365, %v1113, 0
        %1118 = vmatprep.subr.mxu0 0.0
        %1119 = vmatpush1.xpose.msra.mxu0 %v1116
        %1120 = vmatprep.subr.mxu0 0.0
        %1121 = vmatpush1.xpose.msra.mxu0 0.0
        %1122 = vmatprep.subr.mxu0 0.0
        %1123 = vmatpush1.xpose.msra.mxu0 0.0
        %1124 = vmatprep.subr.mxu0 0.0
        %1125 = vmatpush1.xpose.msra.mxu0 0.0
        %1126 = vmatprep.subr.mxu0 0.0
        %1127 = vmatpush1.xpose.msra.mxu0 0.0
        %1128 = vmatprep.subr.mxu0 0.0
        %1129 = vmatpush1.xpose.msra.mxu0 0.0
        %1130 = vmatprep.subr.mxu0 0.0
        %1131 = vmatpush1.xpose.msra.mxu0 0.0
        %1132 = vmatprep.subr.mxu0 0.0
        %1133 = vmatpush1.xpose.msra.mxu0 0.0
        %1134 = vmatprep.subr.mxu0 0.0
        %1135 = vmatpush1.xpose.msra.mxu0 0.0
        %1136 = vmatprep.subr.mxu0 0.0
        %1137 = vmatpush1.xpose.msra.mxu0 0.0
        %1138 = vmatprep.subr.mxu0 0.0
        %1139 = vmatpush1.xpose.msra.mxu0 0.0
        %1140 = vmatprep.subr.mxu0 0.0
        %1141 = vmatpush1.xpose.msra.mxu0 0.0
        %1142 = vmatprep.subr.mxu0 0.0
        %1143 = vmatpush1.xpose.msra.mxu0 0.0
        %1144 = vmatprep.subr.mxu0 0.0
        %1145 = vmatpush1.xpose.msra.mxu0 0.0
        %1146 = vmatprep.subr.mxu0 0.0
        %1147 = vmatpush1.xpose.msra.mxu0 0.0
        %1148 = vmatprep.subr.mxu0 0.0
        %1149 = vmatpush1.xpose.msra.mxu0 0.0
        %1150 = vmatprep.subr.mxu0 0.0
        %1151 = vmatpush1.xpose.msra.mxu0 0.0
        %1152 = vmatprep.subr.mxu0 0.0
        %1153 = vmatpush1.xpose.msra.mxu0 0.0
        %1154 = vmatprep.subr.mxu0 0.0
        %1155 = vmatpush1.xpose.msra.mxu0 0.0
        %1156 = vmatprep.subr.mxu0 0.0
        %1157 = vmatpush1.xpose.msra.mxu0 0.0
        %1158 = vmatprep.subr.mxu0 0.0
        %1159 = vmatpush1.xpose.msra.mxu0 0.0
        %1160 = vmatprep.subr.mxu0 0.0
        %1161 = vmatpush1.xpose.msra.mxu0 0.0
        %1162 = vmatprep.subr.mxu0 0.0
        %1163 = vmatpush1.xpose.msra.mxu0 0.0
        %1164 = vmatprep.subr.mxu0 0.0
        %1165 = vmatpush1.xpose.msra.mxu0 0.0
        %1166 = vmatprep.subr.mxu0 0.0
        %1167 = vmatpush1.xpose.msra.mxu0 0.0
        %1168 = vmatprep.subr.mxu0 0.0
        %1169 = vmatpush1.xpose.msra.mxu0 0.0
        %1170 = vmatprep.subr.mxu0 0.0
        %1171 = vmatpush1.xpose.msra.mxu0 0.0
        %1172 = vmatprep.subr.mxu0 0.0
        %1173 = vmatpush1.xpose.msra.mxu0 0.0
        %1174 = vmatprep.subr.mxu0 0.0
        %1175 = vmatpush1.xpose.msra.mxu0 0.0
        %1176 = vmatprep.subr.mxu0 0.0
        %1177 = vmatpush1.xpose.msra.mxu0 0.0
        %1178 = vmatprep.subr.mxu0 0.0
        %1179 = vmatpush1.xpose.msra.mxu0 0.0
        %1180 = vmatprep.subr.mxu0 0.0
        %1181 = vmatpush1.xpose.msra.mxu0 0.0
        %1182 = vmatprep.mubr.f32.mxu0 0.0
        %1183 = vmatmul.mubr.f32.gmra.mrb[0].mxu0 %v1114
        %v1184 = vpop.f32.mrb[0].mxu0
        %v1185 = vadd.f32 0.0, %v1184
        %v1186 = vpop.f32.mrb[0].mxu0
        %1187 = vdwg.mxu0
        %v1188 = vsel %vm440, %v1185, -inf
        %1189 = vmax.xlane.f32.xlu0 %v1188
        %v1190 = vpop.xlane.xlu0 %1189
        %v1191 = vsub.f32 %v1185, %v1190
        %v1192 = vmul.f32 %v1191, 1.442695
        %v1193 = vpow.pop %v1192
        %v1194 = vsel %vm440, %v1193, 0.0
        %1195 = vadd.xlane.f32.xlu0 %v1194
        %v1196 = vpop.xlane.xlu0 %1195
        %v1197 = vrcp.pop %v1196
        %v1198 = vmul.f32 %v1193, %v1197
        %s1199 = scalar_lea.vmem %s279, 24 [#allocation11]
        %1200 = vst.msk [vmem:[%s1199] sm:$0xff] %vm440, %v1198
        %1201 = vrot.lane.b32.xlu0 %v1108, 52
        %v1202 = vpop.permute.xlu0 %1201
        %v1205 = vsel %vm440, %v1198, 0
        %1207 = vmatprep.subr.mxu0 0.0
        %1208 = vmatpush1.msra.mxu0 %v1202
        %1209 = vmatprep.subr.mxu0 0.0
        %1210 = vmatpush1.msra.mxu0 0.0
        %1211 = vmatprep.subr.mxu0 0.0
        %1212 = vmatpush1.msra.mxu0 0.0
        %1213 = vmatprep.subr.mxu0 0.0
        %1214 = vmatpush1.msra.mxu0 0.0
        %1215 = vmatprep.subr.mxu0 0.0
        %1216 = vmatpush1.msra.mxu0 0.0
        %1217 = vmatprep.subr.mxu0 0.0
        %1218 = vmatpush1.msra.mxu0 0.0
        %1219 = vmatprep.subr.mxu0 0.0
        %1220 = vmatpush1.msra.mxu0 0.0
        %1221 = vmatprep.subr.mxu0 0.0
        %1222 = vmatpush1.msra.mxu0 0.0
        %1223 = vmatprep.subr.mxu0 0.0
        %1224 = vmatpush1.msra.mxu0 0.0
        %1225 = vmatprep.subr.mxu0 0.0
        %1226 = vmatpush1.msra.mxu0 0.0
        %1227 = vmatprep.subr.mxu0 0.0
        %1228 = vmatpush1.msra.mxu0 0.0
        %1229 = vmatprep.subr.mxu0 0.0
        %1230 = vmatpush1.msra.mxu0 0.0
        %1231 = vmatprep.subr.mxu0 0.0
        %1232 = vmatpush1.msra.mxu0 0.0
        %1233 = vmatprep.subr.mxu0 0.0
        %1234 = vmatpush1.msra.mxu0 0.0
        %1235 = vmatprep.subr.mxu0 0.0
        %1236 = vmatpush1.msra.mxu0 0.0
        %1237 = vmatprep.subr.mxu0 0.0
        %1238 = vmatpush1.msra.mxu0 0.0
        %1239 = vmatprep.subr.mxu0 0.0
        %1240 = vmatpush1.msra.mxu0 0.0
        %1241 = vmatprep.subr.mxu0 0.0
        %1242 = vmatpush1.msra.mxu0 0.0
        %1243 = vmatprep.subr.mxu0 0.0
        %1244 = vmatpush1.msra.mxu0 0.0
        %1245 = vmatprep.subr.mxu0 0.0
        %1246 = vmatpush1.msra.mxu0 0.0
        %1247 = vmatprep.subr.mxu0 0.0
        %1248 = vmatpush1.msra.mxu0 0.0
        %1249 = vmatprep.subr.mxu0 0.0
        %1250 = vmatpush1.msra.mxu0 0.0
        %1251 = vmatprep.subr.mxu0 0.0
        %1252 = vmatpush1.msra.mxu0 0.0
        %1253 = vmatprep.subr.mxu0 0.0
        %1254 = vmatpush1.msra.mxu0 0.0
        %1255 = vmatprep.subr.mxu0 0.0
        %1256 = vmatpush1.msra.mxu0 0.0
        %1257 = vmatprep.subr.mxu0 0.0
        %1258 = vmatpush1.msra.mxu0 0.0
        %1259 = vmatprep.subr.mxu0 0.0
        %1260 = vmatpush1.msra.mxu0 0.0
        %1261 = vmatprep.subr.mxu0 0.0
        %1262 = vmatpush1.msra.mxu0 0.0
        %1263 = vmatprep.subr.mxu0 0.0
        %1264 = vmatpush1.msra.mxu0 0.0
        %1265 = vmatprep.subr.mxu0 0.0
        %1266 = vmatpush1.msra.mxu0 0.0
        %1267 = vmatprep.subr.mxu0 0.0
        %1268 = vmatpush1.msra.mxu0 0.0
        %1269 = vmatprep.subr.mxu0 0.0
        %1270 = vmatpush1.msra.mxu0 0.0
        %1271 = vmatprep.mubr.f32.mxu0 0.0
        %1272 = vmatmul.mubr.f32.gmra.mrb[0].mxu0 %v1205
        %v1273 = vpop.f32.mrb[0].mxu0
        %v1274 = vadd.f32 0.0, %v1273
        %v1275 = vpop.f32.mrb[0].mxu0
        %1276 = vdwg.mxu0
        %s1277 = scalar_lea.vmem [#allocation9], 12
        %v1278 = vld [vmem:[%s1277] sm:$0xf]
        %v1280 = vsel %vm365, %v1274, 0
        %v1283 = vsel %vm533, %v1278, 0
        %1285 = vmatprep.subr.mxu0 0.0
        %1286 = vmatpush1.msra.mxu0 %v1283
        %1287 = vmatprep.subr.mxu0 0.0
        %1288 = vmatpush1.msra.mxu0 0.0
        %1289 = vmatprep.subr.mxu0 0.0
        %1290 = vmatpush1.msra.mxu0 0.0
        %1291 = vmatprep.subr.mxu0 0.0
        %1292 = vmatpush1.msra.mxu0 0.0
        %1293 = vmatprep.subr.mxu0 0.0
        %1294 = vmatpush1.msra.mxu0 0.0
        %1295 = vmatprep.subr.mxu0 0.0
        %1296 = vmatpush1.msra.mxu0 0.0
        %1297 = vmatprep.subr.mxu0 0.0
        %1298 = vmatpush1.msra.mxu0 0.0
        %1299 = vmatprep.subr.mxu0 0.0
        %1300 = vmatpush1.msra.mxu0 0.0
        %1301 = vmatprep.subr.mxu0 0.0
        %1302 = vmatpush1.msra.mxu0 0.0
        %1303 = vmatprep.subr.mxu0 0.0
        %1304 = vmatpush1.msra.mxu0 0.0
        %1305 = vmatprep.subr.mxu0 0.0
        %1306 = vmatpush1.msra.mxu0 0.0
        %1307 = vmatprep.subr.mxu0 0.0
        %1308 = vmatpush1.msra.mxu0 0.0
        %1309 = vmatprep.subr.mxu0 0.0
        %1310 = vmatpush1.msra.mxu0 0.0
        %1311 = vmatprep.subr.mxu0 0.0
        %1312 = vmatpush1.msra.mxu0 0.0
        %1313 = vmatprep.subr.mxu0 0.0
        %1314 = vmatpush1.msra.mxu0 0.0
        %1315 = vmatprep.subr.mxu0 0.0
        %1316 = vmatpush1.msra.mxu0 0.0
        %1317 = vmatprep.subr.mxu0 0.0
        %1318 = vmatpush1.msra.mxu0 0.0
        %1319 = vmatprep.subr.mxu0 0.0
        %1320 = vmatpush1.msra.mxu0 0.0
        %1321 = vmatprep.subr.mxu0 0.0
        %1322 = vmatpush1.msra.mxu0 0.0
        %1323 = vmatprep.subr.mxu0 0.0
        %1324 = vmatpush1.msra.mxu0 0.0
        %1325 = vmatprep.subr.mxu0 0.0
        %1326 = vmatpush1.msra.mxu0 0.0
        %1327 = vmatprep.subr.mxu0 0.0
        %1328 = vmatpush1.msra.mxu0 0.0
        %1329 = vmatprep.subr.mxu0 0.0
        %1330 = vmatpush1.msra.mxu0 0.0
        %1331 = vmatprep.subr.mxu0 0.0
        %1332 = vmatpush1.msra.mxu0 0.0
        %1333 = vmatprep.subr.mxu0 0.0
        %1334 = vmatpush1.msra.mxu0 0.0
        %1335 = vmatprep.subr.mxu0 0.0
        %1336 = vmatpush1.msra.mxu0 0.0
        %1337 = vmatprep.subr.mxu0 0.0
        %1338 = vmatpush1.msra.mxu0 0.0
        %1339 = vmatprep.subr.mxu0 0.0
        %1340 = vmatpush1.msra.mxu0 0.0
        %1341 = vmatprep.subr.mxu0 0.0
        %1342 = vmatpush1.msra.mxu0 0.0
        %1343 = vmatprep.subr.mxu0 0.0
        %1344 = vmatpush1.msra.mxu0 0.0
        %1345 = vmatprep.subr.mxu0 0.0
        %1346 = vmatpush1.msra.mxu0 0.0
        %1347 = vmatprep.subr.mxu0 0.0
        %1348 = vmatpush1.msra.mxu0 0.0
        %1349 = vmatprep.mubr.f32.mxu0 0.0
        %1350 = vmatmul.mubr.f32.gmra.mrb[0].mxu0 %v1280
        %v1351 = vpop.f32.mrb[0].mxu0
        %v1352 = vadd.f32 0.0, %v1351
        %v1353 = vpop.f32.mrb[0].mxu0
        %1354 = vdwg.mxu0
        %v1355 = vld [vmem:[#allocation3] sm:$0xff]
        %v1356 = vadd.f32 %v1355, %v1352
        %1357 = vst.msk [vmem:[#allocation3] sm:$0xff] %vm285, %v1356
        %v1358 = vld [vmem:[#allocation2] sm:$0xff]
        %1360 = vrot.lane.b32.xlu0 %v1358, 112
        %v1361 = vpop.permute.xlu0 %1360
        %1362 = vrot.lane.b32.xlu0 %v1358, 80
        %v1363 = vpop.permute.xlu0 %1362
        %v1364 = vsel %vm365, %v1361, 0
        %v1366 = vsel %vm365, %v1363, 0
        %1368 = vmatprep.subr.mxu0 0.0
        %1369 = vmatpush1.xpose.msra.mxu0 %v1366
        %1370 = vmatprep.subr.mxu0 0.0
        %1371 = vmatpush1.xpose.msra.mxu0 0.0
        %1372 = vmatprep.subr.mxu0 0.0
        %1373 = vmatpush1.xpose.msra.mxu0 0.0
        %1374 = vmatprep.subr.mxu0 0.0
        %1375 = vmatpush1.xpose.msra.mxu0 0.0
        %1376 = vmatprep.subr.mxu0 0.0
        %1377 = vmatpush1.xpose.msra.mxu0 0.0
        %1378 = vmatprep.subr.mxu0 0.0
        %1379 = vmatpush1.xpose.msra.mxu0 0.0
        %1380 = vmatprep.subr.mxu0 0.0
        %1381 = vmatpush1.xpose.msra.mxu0 0.0
        %1382 = vmatprep.subr.mxu0 0.0
        %1383 = vmatpush1.xpose.msra.mxu0 0.0
        %1384 = vmatprep.subr.mxu0 0.0
        %1385 = vmatpush1.xpose.msra.mxu0 0.0
        %1386 = vmatprep.subr.mxu0 0.0
        %1387 = vmatpush1.xpose.msra.mxu0 0.0
        %1388 = vmatprep.subr.mxu0 0.0
        %1389 = vmatpush1.xpose.msra.mxu0 0.0
        %1390 = vmatprep.subr.mxu0 0.0
        %1391 = vmatpush1.xpose.msra.mxu0 0.0
        %1392 = vmatprep.subr.mxu0 0.0
        %1393 = vmatpush1.xpose.msra.mxu0 0.0
        %1394 = vmatprep.subr.mxu0 0.0
        %1395 = vmatpush1.xpose.msra.mxu0 0.0
        %1396 = vmatprep.subr.mxu0 0.0
        %1397 = vmatpush1.xpose.msra.mxu0 0.0
        %1398 = vmatprep.subr.mxu0 0.0
        %1399 = vmatpush1.xpose.msra.mxu0 0.0
        %1400 = vmatprep.subr.mxu0 0.0
        %1401 = vmatpush1.xpose.msra.mxu0 0.0
        %1402 = vmatprep.subr.mxu0 0.0
        %1403 = vmatpush1.xpose.msra.mxu0 0.0
        %1404 = vmatprep.subr.mxu0 0.0
        %1405 = vmatpush1.xpose.msra.mxu0 0.0
        %1406 = vmatprep.subr.mxu0 0.0
        %1407 = vmatpush1.xpose.msra.mxu0 0.0
        %1408 = vmatprep.subr.mxu0 0.0
        %1409 = vmatpush1.xpose.msra.mxu0 0.0
        %1410 = vmatprep.subr.mxu0 0.0
        %1411 = vmatpush1.xpose.msra.mxu0 0.0
        %1412 = vmatprep.subr.mxu0 0.0
        %1413 = vmatpush1.xpose.msra.mxu0 0.0
        %1414 = vmatprep.subr.mxu0 0.0
        %1415 = vmatpush1.xpose.msra.mxu0 0.0
        %1416 = vmatprep.subr.mxu0 0.0
        %1417 = vmatpush1.xpose.msra.mxu0 0.0
        %1418 = vmatprep.subr.mxu0 0.0
        %1419 = vmatpush1.xpose.msra.mxu0 0.0
        %1420 = vmatprep.subr.mxu0 0.0
        %1421 = vmatpush1.xpose.msra.mxu0 0.0
        %1422 = vmatprep.subr.mxu0 0.0
        %1423 = vmatpush1.xpose.msra.mxu0 0.0
        %1424 = vmatprep.subr.mxu0 0.0
        %1425 = vmatpush1.xpose.msra.mxu0 0.0
        %1426 = vmatprep.subr.mxu0 0.0
        %1427 = vmatpush1.xpose.msra.mxu0 0.0
        %1428 = vmatprep.subr.mxu0 0.0
        %1429 = vmatpush1.xpose.msra.mxu0 0.0
        %1430 = vmatprep.subr.mxu0 0.0
        %1431 = vmatpush1.xpose.msra.mxu0 0.0
        %1432 = vmatprep.mubr.f32.mxu0 0.0
        %1433 = vmatmul.mubr.f32.gmra.mrb[0].mxu0 %v1364
        %v1434 = vpop.f32.mrb[0].mxu0
        %v1435 = vadd.f32 0.0, %v1434
        %v1436 = vpop.f32.mrb[0].mxu0
        %1437 = vdwg.mxu0
        %v1438 = vsel %vm440, %v1435, -inf
        %1439 = vmax.xlane.f32.xlu0 %v1438
        %v1440 = vpop.xlane.xlu0 %1439
        %v1441 = vsub.f32 %v1435, %v1440
        %v1442 = vmul.f32 %v1441, 1.442695
        %v1443 = vpow.pop %v1442
        %v1444 = vsel %vm440, %v1443, 0.0
        %1445 = vadd.xlane.f32.xlu0 %v1444
        %v1446 = vpop.xlane.xlu0 %1445
        %v1447 = vrcp.pop %v1446
        %v1448 = vmul.f32 %v1443, %v1447
        %s1449 = scalar_lea.vmem %s279, 32 [#allocation11]
        %1450 = vst.msk [vmem:[%s1449] sm:$0xff] %vm440, %v1448
        %1451 = vrot.lane.b32.xlu0 %v1358, 48
        %v1452 = vpop.permute.xlu0 %1451
        %v1455 = vsel %vm440, %v1448, 0
        %1457 = vmatprep.subr.mxu0 0.0
        %1458 = vmatpush1.msra.mxu0 %v1452
        %1459 = vmatprep.subr.mxu0 0.0
        %1460 = vmatpush1.msra.mxu0 0.0
        %1461 = vmatprep.subr.mxu0 0.0
        %1462 = vmatpush1.msra.mxu0 0.0
        %1463 = vmatprep.subr.mxu0 0.0
        %1464 = vmatpush1.msra.mxu0 0.0
        %1465 = vmatprep.subr.mxu0 0.0
        %1466 = vmatpush1.msra.mxu0 0.0
        %1467 = vmatprep.subr.mxu0 0.0
        %1468 = vmatpush1.msra.mxu0 0.0
        %1469 = vmatprep.subr.mxu0 0.0
        %1470 = vmatpush1.msra.mxu0 0.0
        %1471 = vmatprep.subr.mxu0 0.0
        %1472 = vmatpush1.msra.mxu0 0.0
        %1473 = vmatprep.subr.mxu0 0.0
        %1474 = vmatpush1.msra.mxu0 0.0
        %1475 = vmatprep.subr.mxu0 0.0
        %1476 = vmatpush1.msra.mxu0 0.0
        %1477 = vmatprep.subr.mxu0 0.0
        %1478 = vmatpush1.msra.mxu0 0.0
        %1479 = vmatprep.subr.mxu0 0.0
        %1480 = vmatpush1.msra.mxu0 0.0
        %1481 = vmatprep.subr.mxu0 0.0
        %1482 = vmatpush1.msra.mxu0 0.0
        %1483 = vmatprep.subr.mxu0 0.0
        %1484 = vmatpush1.msra.mxu0 0.0
        %1485 = vmatprep.subr.mxu0 0.0
        %1486 = vmatpush1.msra.mxu0 0.0
        %1487 = vmatprep.subr.mxu0 0.0
        %1488 = vmatpush1.msra.mxu0 0.0
        %1489 = vmatprep.subr.mxu0 0.0
        %1490 = vmatpush1.msra.mxu0 0.0
        %1491 = vmatprep.subr.mxu0 0.0
        %1492 = vmatpush1.msra.mxu0 0.0
        %1493 = vmatprep.subr.mxu0 0.0
        %1494 = vmatpush1.msra.mxu0 0.0
        %1495 = vmatprep.subr.mxu0 0.0
        %1496 = vmatpush1.msra.mxu0 0.0
        %1497 = vmatprep.subr.mxu0 0.0
        %1498 = vmatpush1.msra.mxu0 0.0
        %1499 = vmatprep.subr.mxu0 0.0
        %1500 = vmatpush1.msra.mxu0 0.0
        %1501 = vmatprep.subr.mxu0 0.0
        %1502 = vmatpush1.msra.mxu0 0.0
        %1503 = vmatprep.subr.mxu0 0.0
        %1504 = vmatpush1.msra.mxu0 0.0
        %1505 = vmatprep.subr.mxu0 0.0
        %1506 = vmatpush1.msra.mxu0 0.0
        %1507 = vmatprep.subr.mxu0 0.0
        %1508 = vmatpush1.msra.mxu0 0.0
        %1509 = vmatprep.subr.mxu0 0.0
        %1510 = vmatpush1.msra.mxu0 0.0
        %1511 = vmatprep.subr.mxu0 0.0
        %1512 = vmatpush1.msra.mxu0 0.0
        %1513 = vmatprep.subr.mxu0 0.0
        %1514 = vmatpush1.msra.mxu0 0.0
        %1515 = vmatprep.subr.mxu0 0.0
        %1516 = vmatpush1.msra.mxu0 0.0
        %1517 = vmatprep.subr.mxu0 0.0
        %1518 = vmatpush1.msra.mxu0 0.0
        %1519 = vmatprep.subr.mxu0 0.0
        %1520 = vmatpush1.msra.mxu0 0.0
        %1521 = vmatprep.mubr.f32.mxu0 0.0
        %1522 = vmatmul.mubr.f32.gmra.mrb[0].mxu0 %v1455
        %v1523 = vpop.f32.mrb[0].mxu0
        %v1524 = vadd.f32 0.0, %v1523
        %v1525 = vpop.f32.mrb[0].mxu0
        %1526 = vdwg.mxu0
        %s1527 = scalar_lea.vmem [#allocation9], 16
        %v1528 = vld [vmem:[%s1527] sm:$0xf]
        %v1530 = vsel %vm365, %v1524, 0
        %v1533 = vsel %vm533, %v1528, 0
        %1535 = vmatprep.subr.mxu0 0.0
        %1536 = vmatpush1.msra.mxu0 %v1533
        %1537 = vmatprep.subr.mxu0 0.0
        %1538 = vmatpush1.msra.mxu0 0.0
        %1539 = vmatprep.subr.mxu0 0.0
        %1540 = vmatpush1.msra.mxu0 0.0
        %1541 = vmatprep.subr.mxu0 0.0
        %1542 = vmatpush1.msra.mxu0 0.0
        %1543 = vmatprep.subr.mxu0 0.0
        %1544 = vmatpush1.msra.mxu0 0.0
        %1545 = vmatprep.subr.mxu0 0.0
        %1546 = vmatpush1.msra.mxu0 0.0
        %1547 = vmatprep.subr.mxu0 0.0
        %1548 = vmatpush1.msra.mxu0 0.0
        %1549 = vmatprep.subr.mxu0 0.0
        %1550 = vmatpush1.msra.mxu0 0.0
        %1551 = vmatprep.subr.mxu0 0.0
        %1552 = vmatpush1.msra.mxu0 0.0
        %1553 = vmatprep.subr.mxu0 0.0
        %1554 = vmatpush1.msra.mxu0 0.0
        %1555 = vmatprep.subr.mxu0 0.0
        %1556 = vmatpush1.msra.mxu0 0.0
        %1557 = vmatprep.subr.mxu0 0.0
        %1558 = vmatpush1.msra.mxu0 0.0
        %1559 = vmatprep.subr.mxu0 0.0
        %1560 = vmatpush1.msra.mxu0 0.0
        %1561 = vmatprep.subr.mxu0 0.0
        %1562 = vmatpush1.msra.mxu0 0.0
        %1563 = vmatprep.subr.mxu0 0.0
        %1564 = vmatpush1.msra.mxu0 0.0
        %1565 = vmatprep.subr.mxu0 0.0
        %1566 = vmatpush1.msra.mxu0 0.0
        %1567 = vmatprep.subr.mxu0 0.0
        %1568 = vmatpush1.msra.mxu0 0.0
        %1569 = vmatprep.subr.mxu0 0.0
        %1570 = vmatpush1.msra.mxu0 0.0
        %1571 = vmatprep.subr.mxu0 0.0
        %1572 = vmatpush1.msra.mxu0 0.0
        %1573 = vmatprep.subr.mxu0 0.0
        %1574 = vmatpush1.msra.mxu0 0.0
        %1575 = vmatprep.subr.mxu0 0.0
        %1576 = vmatpush1.msra.mxu0 0.0
        %1577 = vmatprep.subr.mxu0 0.0
        %1578 = vmatpush1.msra.mxu0 0.0
        %1579 = vmatprep.subr.mxu0 0.0
        %1580 = vmatpush1.msra.mxu0 0.0
        %1581 = vmatprep.subr.mxu0 0.0
        %1582 = vmatpush1.msra.mxu0 0.0
        %1583 = vmatprep.subr.mxu0 0.0
        %1584 = vmatpush1.msra.mxu0 0.0
        %1585 = vmatprep.subr.mxu0 0.0
        %1586 = vmatpush1.msra.mxu0 0.0
        %1587 = vmatprep.subr.mxu0 0.0
        %1588 = vmatpush1.msra.mxu0 0.0
        %1589 = vmatprep.subr.mxu0 0.0
        %1590 = vmatpush1.msra.mxu0 0.0
        %1591 = vmatprep.subr.mxu0 0.0
        %1592 = vmatpush1.msra.mxu0 0.0
        %1593 = vmatprep.subr.mxu0 0.0
        %1594 = vmatpush1.msra.mxu0 0.0
        %1595 = vmatprep.subr.mxu0 0.0
        %1596 = vmatpush1.msra.mxu0 0.0
        %1597 = vmatprep.subr.mxu0 0.0
        %1598 = vmatpush1.msra.mxu0 0.0
        %1599 = vmatprep.mubr.f32.mxu0 0.0
        %1600 = vmatmul.mubr.f32.gmra.mrb[0].mxu0 %v1530
        %v1601 = vpop.f32.mrb[0].mxu0
        %v1602 = vadd.f32 0.0, %v1601
        %v1603 = vpop.f32.mrb[0].mxu0
        %1604 = vdwg.mxu0
        %v1605 = vld [vmem:[#allocation3] sm:$0xff]
        %v1606 = vadd.f32 %v1605, %v1602
        %1607 = vst.msk [vmem:[#allocation3] sm:$0xff] %vm285, %v1606
        %v1608 = vld [vmem:[#allocation2] sm:$0xff]
        %1610 = vrot.lane.b32.xlu0 %v1608, 108
        %v1611 = vpop.permute.xlu0 %1610
        %1612 = vrot.lane.b32.xlu0 %v1608, 76
        %v1613 = vpop.permute.xlu0 %1612
        %v1614 = vsel %vm365, %v1611, 0
        %v1616 = vsel %vm365, %v1613, 0
        %1618 = vmatprep.subr.mxu0 0.0
        %1619 = vmatpush1.xpose.msra.mxu0 %v1616
        %1620 = vmatprep.subr.mxu0 0.0
        %1621 = vmatpush1.xpose.msra.mxu0 0.0
        %1622 = vmatprep.subr.mxu0 0.0
        %1623 = vmatpush1.xpose.msra.mxu0 0.0
        %1624 = vmatprep.subr.mxu0 0.0
        %1625 = vmatpush1.xpose.msra.mxu0 0.0
        %1626 = vmatprep.subr.mxu0 0.0
        %1627 = vmatpush1.xpose.msra.mxu0 0.0
        %1628 = vmatprep.subr.mxu0 0.0
        %1629 = vmatpush1.xpose.msra.mxu0 0.0
        %1630 = vmatprep.subr.mxu0 0.0
        %1631 = vmatpush1.xpose.msra.mxu0 0.0
        %1632 = vmatprep.subr.mxu0 0.0
        %1633 = vmatpush1.xpose.msra.mxu0 0.0
        %1634 = vmatprep.subr.mxu0 0.0
        %1635 = vmatpush1.xpose.msra.mxu0 0.0
        %1636 = vmatprep.subr.mxu0 0.0
        %1637 = vmatpush1.xpose.msra.mxu0 0.0
        %1638 = vmatprep.subr.mxu0 0.0
        %1639 = vmatpush1.xpose.msra.mxu0 0.0
        %1640 = vmatprep.subr.mxu0 0.0
        %1641 = vmatpush1.xpose.msra.mxu0 0.0
        %1642 = vmatprep.subr.mxu0 0.0
        %1643 = vmatpush1.xpose.msra.mxu0 0.0
        %1644 = vmatprep.subr.mxu0 0.0
        %1645 = vmatpush1.xpose.msra.mxu0 0.0
        %1646 = vmatprep.subr.mxu0 0.0
        %1647 = vmatpush1.xpose.msra.mxu0 0.0
        %1648 = vmatprep.subr.mxu0 0.0
        %1649 = vmatpush1.xpose.msra.mxu0 0.0
        %1650 = vmatprep.subr.mxu0 0.0
        %1651 = vmatpush1.xpose.msra.mxu0 0.0
        %1652 = vmatprep.subr.mxu0 0.0
        %1653 = vmatpush1.xpose.msra.mxu0 0.0
        %1654 = vmatprep.subr.mxu0 0.0
        %1655 = vmatpush1.xpose.msra.mxu0 0.0
        %1656 = vmatprep.subr.mxu0 0.0
        %1657 = vmatpush1.xpose.msra.mxu0 0.0
        %1658 = vmatprep.subr.mxu0 0.0
        %1659 = vmatpush1.xpose.msra.mxu0 0.0
        %1660 = vmatprep.subr.mxu0 0.0
        %1661 = vmatpush1.xpose.msra.mxu0 0.0
        %1662 = vmatprep.subr.mxu0 0.0
        %1663 = vmatpush1.xpose.msra.mxu0 0.0
        %1664 = vmatprep.subr.mxu0 0.0
        %1665 = vmatpush1.xpose.msra.mxu0 0.0
        %1666 = vmatprep.subr.mxu0 0.0
        %1667 = vmatpush1.xpose.msra.mxu0 0.0
        %1668 = vmatprep.subr.mxu0 0.0
        %1669 = vmatpush1.xpose.msra.mxu0 0.0
        %1670 = vmatprep.subr.mxu0 0.0
        %1671 = vmatpush1.xpose.msra.mxu0 0.0
        %1672 = vmatprep.subr.mxu0 0.0
        %1673 = vmatpush1.xpose.msra.mxu0 0.0
        %1674 = vmatprep.subr.mxu0 0.0
        %1675 = vmatpush1.xpose.msra.mxu0 0.0
        %1676 = vmatprep.subr.mxu0 0.0
        %1677 = vmatpush1.xpose.msra.mxu0 0.0
        %1678 = vmatprep.subr.mxu0 0.0
        %1679 = vmatpush1.xpose.msra.mxu0 0.0
        %1680 = vmatprep.subr.mxu0 0.0
        %1681 = vmatpush1.xpose.msra.mxu0 0.0
        %1682 = vmatprep.mubr.f32.mxu0 0.0
        %1683 = vmatmul.mubr.f32.gmra.mrb[0].mxu0 %v1614
        %v1684 = vpop.f32.mrb[0].mxu0
        %v1685 = vadd.f32 0.0, %v1684
        %v1686 = vpop.f32.mrb[0].mxu0
        %1687 = vdwg.mxu0
        %v1688 = vsel %vm440, %v1685, -inf
        %1689 = vmax.xlane.f32.xlu0 %v1688
        %v1690 = vpop.xlane.xlu0 %1689
        %v1691 = vsub.f32 %v1685, %v1690
        %v1692 = vmul.f32 %v1691, 1.442695
        %v1693 = vpow.pop %v1692
        %v1694 = vsel %vm440, %v1693, 0.0
        %1695 = vadd.xlane.f32.xlu0 %v1694
        %v1696 = vpop.xlane.xlu0 %1695
        %v1697 = vrcp.pop %v1696
        %v1698 = vmul.f32 %v1693, %v1697
        %s1699 = scalar_lea.vmem %s279, 40 [#allocation11]
        %1700 = vst.msk [vmem:[%s1699] sm:$0xff] %vm440, %v1698
        %1701 = vrot.lane.b32.xlu0 %v1608, 44
        %v1702 = vpop.permute.xlu0 %1701
        %v1705 = vsel %vm440, %v1698, 0
        %1707 = vmatprep.subr.mxu0 0.0
        %1708 = vmatpush1.msra.mxu0 %v1702
        %1709 = vmatprep.subr.mxu0 0.0
        %1710 = vmatpush1.msra.mxu0 0.0
        %1711 = vmatprep.subr.mxu0 0.0
        %1712 = vmatpush1.msra.mxu0 0.0
        %1713 = vmatprep.subr.mxu0 0.0
        %1714 = vmatpush1.msra.mxu0 0.0
        %1715 = vmatprep.subr.mxu0 0.0
        %1716 = vmatpush1.msra.mxu0 0.0
        %1717 = vmatprep.subr.mxu0 0.0
        %1718 = vmatpush1.msra.mxu0 0.0
        %1719 = vmatprep.subr.mxu0 0.0
        %1720 = vmatpush1.msra.mxu0 0.0
        %1721 = vmatprep.subr.mxu0 0.0
        %1722 = vmatpush1.msra.mxu0 0.0
        %1723 = vmatprep.subr.mxu0 0.0
        %1724 = vmatpush1.msra.mxu0 0.0
        %1725 = vmatprep.subr.mxu0 0.0
        %1726 = vmatpush1.msra.mxu0 0.0
        %1727 = vmatprep.subr.mxu0 0.0
        %1728 = vmatpush1.msra.mxu0 0.0
        %1729 = vmatprep.subr.mxu0 0.0
        %1730 = vmatpush1.msra.mxu0 0.0
        %1731 = vmatprep.subr.mxu0 0.0
        %1732 = vmatpush1.msra.mxu0 0.0
        %1733 = vmatprep.subr.mxu0 0.0
        %1734 = vmatpush1.msra.mxu0 0.0
        %1735 = vmatprep.subr.mxu0 0.0
        %1736 = vmatpush1.msra.mxu0 0.0
        %1737 = vmatprep.subr.mxu0 0.0
        %1738 = vmatpush1.msra.mxu0 0.0
        %1739 = vmatprep.subr.mxu0 0.0
        %1740 = vmatpush1.msra.mxu0 0.0
        %1741 = vmatprep.subr.mxu0 0.0
        %1742 = vmatpush1.msra.mxu0 0.0
        %1743 = vmatprep.subr.mxu0 0.0
        %1744 = vmatpush1.msra.mxu0 0.0
        %1745 = vmatprep.subr.mxu0 0.0
        %1746 = vmatpush1.msra.mxu0 0.0
        %1747 = vmatprep.subr.mxu0 0.0
        %1748 = vmatpush1.msra.mxu0 0.0
        %1749 = vmatprep.subr.mxu0 0.0
        %1750 = vmatpush1.msra.mxu0 0.0
        %1751 = vmatprep.subr.mxu0 0.0
        %1752 = vmatpush1.msra.mxu0 0.0
        %1753 = vmatprep.subr.mxu0 0.0
        %1754 = vmatpush1.msra.mxu0 0.0
        %1755 = vmatprep.subr.mxu0 0.0
        %1756 = vmatpush1.msra.mxu0 0.0
        %1757 = vmatprep.subr.mxu0 0.0
        %1758 = vmatpush1.msra.mxu0 0.0
        %1759 = vmatprep.subr.mxu0 0.0
        %1760 = vmatpush1.msra.mxu0 0.0
        %1761 = vmatprep.subr.mxu0 0.0
        %1762 = vmatpush1.msra.mxu0 0.0
        %1763 = vmatprep.subr.mxu0 0.0
        %1764 = vmatpush1.msra.mxu0 0.0
        %1765 = vmatprep.subr.mxu0 0.0
        %1766 = vmatpush1.msra.mxu0 0.0
        %1767 = vmatprep.subr.mxu0 0.0
        %1768 = vmatpush1.msra.mxu0 0.0
        %1769 = vmatprep.subr.mxu0 0.0
        %1770 = vmatpush1.msra.mxu0 0.0
        %1771 = vmatprep.mubr.f32.mxu0 0.0
        %1772 = vmatmul.mubr.f32.gmra.mrb[0].mxu0 %v1705
        %v1773 = vpop.f32.mrb[0].mxu0
        %v1774 = vadd.f32 0.0, %v1773
        %v1775 = vpop.f32.mrb[0].mxu0
        %1776 = vdwg.mxu0
        %s1777 = scalar_lea.vmem [#allocation9], 20
        %v1778 = vld [vmem:[%s1777] sm:$0xf]
        %v1780 = vsel %vm365, %v1774, 0
        %v1783 = vsel %vm533, %v1778, 0
        %1785 = vmatprep.subr.mxu0 0.0
        %1786 = vmatpush1.msra.mxu0 %v1783
        %1787 = vmatprep.subr.mxu0 0.0
        %1788 = vmatpush1.msra.mxu0 0.0
        %1789 = vmatprep.subr.mxu0 0.0
        %1790 = vmatpush1.msra.mxu0 0.0
        %1791 = vmatprep.subr.mxu0 0.0
        %1792 = vmatpush1.msra.mxu0 0.0
        %1793 = vmatprep.subr.mxu0 0.0
        %1794 = vmatpush1.msra.mxu0 0.0
        %1795 = vmatprep.subr.mxu0 0.0
        %1796 = vmatpush1.msra.mxu0 0.0
        %1797 = vmatprep.subr.mxu0 0.0
        %1798 = vmatpush1.msra.mxu0 0.0
        %1799 = vmatprep.subr.mxu0 0.0
        %1800 = vmatpush1.msra.mxu0 0.0
        %1801 = vmatprep.subr.mxu0 0.0
        %1802 = vmatpush1.msra.mxu0 0.0
        %1803 = vmatprep.subr.mxu0 0.0
        %1804 = vmatpush1.msra.mxu0 0.0
        %1805 = vmatprep.subr.mxu0 0.0
        %1806 = vmatpush1.msra.mxu0 0.0
        %1807 = vmatprep.subr.mxu0 0.0
        %1808 = vmatpush1.msra.mxu0 0.0
        %1809 = vmatprep.subr.mxu0 0.0
        %1810 = vmatpush1.msra.mxu0 0.0
        %1811 = vmatprep.subr.mxu0 0.0
        %1812 = vmatpush1.msra.mxu0 0.0
        %1813 = vmatprep.subr.mxu0 0.0
        %1814 = vmatpush1.msra.mxu0 0.0
        %1815 = vmatprep.subr.mxu0 0.0
        %1816 = vmatpush1.msra.mxu0 0.0
        %1817 = vmatprep.subr.mxu0 0.0
        %1818 = vmatpush1.msra.mxu0 0.0
        %1819 = vmatprep.subr.mxu0 0.0
        %1820 = vmatpush1.msra.mxu0 0.0
        %1821 = vmatprep.subr.mxu0 0.0
        %1822 = vmatpush1.msra.mxu0 0.0
        %1823 = vmatprep.subr.mxu0 0.0
        %1824 = vmatpush1.msra.mxu0 0.0
        %1825 = vmatprep.subr.mxu0 0.0
        %1826 = vmatpush1.msra.mxu0 0.0
        %1827 = vmatprep.subr.mxu0 0.0
        %1828 = vmatpush1.msra.mxu0 0.0
        %1829 = vmatprep.subr.mxu0 0.0
        %1830 = vmatpush1.msra.mxu0 0.0
        %1831 = vmatprep.subr.mxu0 0.0
        %1832 = vmatpush1.msra.mxu0 0.0
        %1833 = vmatprep.subr.mxu0 0.0
        %1834 = vmatpush1.msra.mxu0 0.0
        %1835 = vmatprep.subr.mxu0 0.0
        %1836 = vmatpush1.msra.mxu0 0.0
        %1837 = vmatprep.subr.mxu0 0.0
        %1838 = vmatpush1.msra.mxu0 0.0
        %1839 = vmatprep.subr.mxu0 0.0
        %1840 = vmatpush1.msra.mxu0 0.0
        %1841 = vmatprep.subr.mxu0 0.0
        %1842 = vmatpush1.msra.mxu0 0.0
        %1843 = vmatprep.subr.mxu0 0.0
        %1844 = vmatpush1.msra.mxu0 0.0
        %1845 = vmatprep.subr.mxu0 0.0
        %1846 = vmatpush1.msra.mxu0 0.0
        %1847 = vmatprep.subr.mxu0 0.0
        %1848 = vmatpush1.msra.mxu0 0.0
        %1849 = vmatprep.mubr.f32.mxu0 0.0
        %1850 = vmatmul.mubr.f32.gmra.mrb[0].mxu0 %v1780
        %v1851 = vpop.f32.mrb[0].mxu0
        %v1852 = vadd.f32 0.0, %v1851
        %v1853 = vpop.f32.mrb[0].mxu0
        %1854 = vdwg.mxu0
        %v1855 = vld [vmem:[#allocation3] sm:$0xff]
        %v1856 = vadd.f32 %v1855, %v1852
        %1857 = vst.msk [vmem:[#allocation3] sm:$0xff] %vm285, %v1856
        %v1858 = vld [vmem:[#allocation2] sm:$0xff]
        %1860 = vrot.lane.b32.xlu0 %v1858, 104
        %v1861 = vpop.permute.xlu0 %1860
        %1862 = vrot.lane.b32.xlu0 %v1858, 72
        %v1863 = vpop.permute.xlu0 %1862
        %v1864 = vsel %vm365, %v1861, 0
        %v1866 = vsel %vm365, %v1863, 0
        %1868 = vmatprep.subr.mxu0 0.0
        %1869 = vmatpush1.xpose.msra.mxu0 %v1866
        %1870 = vmatprep.subr.mxu0 0.0
        %1871 = vmatpush1.xpose.msra.mxu0 0.0
        %1872 = vmatprep.subr.mxu0 0.0
        %1873 = vmatpush1.xpose.msra.mxu0 0.0
        %1874 = vmatprep.subr.mxu0 0.0
        %1875 = vmatpush1.xpose.msra.mxu0 0.0
        %1876 = vmatprep.subr.mxu0 0.0
        %1877 = vmatpush1.xpose.msra.mxu0 0.0
        %1878 = vmatprep.subr.mxu0 0.0
        %1879 = vmatpush1.xpose.msra.mxu0 0.0
        %1880 = vmatprep.subr.mxu0 0.0
        %1881 = vmatpush1.xpose.msra.mxu0 0.0
        %1882 = vmatprep.subr.mxu0 0.0
        %1883 = vmatpush1.xpose.msra.mxu0 0.0
        %1884 = vmatprep.subr.mxu0 0.0
        %1885 = vmatpush1.xpose.msra.mxu0 0.0
        %1886 = vmatprep.subr.mxu0 0.0
        %1887 = vmatpush1.xpose.msra.mxu0 0.0
        %1888 = vmatprep.subr.mxu0 0.0
        %1889 = vmatpush1.xpose.msra.mxu0 0.0
        %1890 = vmatprep.subr.mxu0 0.0
        %1891 = vmatpush1.xpose.msra.mxu0 0.0
        %1892 = vmatprep.subr.mxu0 0.0
        %1893 = vmatpush1.xpose.msra.mxu0 0.0
        %1894 = vmatprep.subr.mxu0 0.0
        %1895 = vmatpush1.xpose.msra.mxu0 0.0
        %1896 = vmatprep.subr.mxu0 0.0
        %1897 = vmatpush1.xpose.msra.mxu0 0.0
        %1898 = vmatprep.subr.mxu0 0.0
        %1899 = vmatpush1.xpose.msra.mxu0 0.0
        %1900 = vmatprep.subr.mxu0 0.0
        %1901 = vmatpush1.xpose.msra.mxu0 0.0
        %1902 = vmatprep.subr.mxu0 0.0
        %1903 = vmatpush1.xpose.msra.mxu0 0.0
        %1904 = vmatprep.subr.mxu0 0.0
        %1905 = vmatpush1.xpose.msra.mxu0 0.0
        %1906 = vmatprep.subr.mxu0 0.0
        %1907 = vmatpush1.xpose.msra.mxu0 0.0
        %1908 = vmatprep.subr.mxu0 0.0
        %1909 = vmatpush1.xpose.msra.mxu0 0.0
        %1910 = vmatprep.subr.mxu0 0.0
        %1911 = vmatpush1.xpose.msra.mxu0 0.0
        %1912 = vmatprep.subr.mxu0 0.0
        %1913 = vmatpush1.xpose.msra.mxu0 0.0
        %1914 = vmatprep.subr.mxu0 0.0
        %1915 = vmatpush1.xpose.msra.mxu0 0.0
        %1916 = vmatprep.subr.mxu0 0.0
        %1917 = vmatpush1.xpose.msra.mxu0 0.0
        %1918 = vmatprep.subr.mxu0 0.0
        %1919 = vmatpush1.xpose.msra.mxu0 0.0
        %1920 = vmatprep.subr.mxu0 0.0
        %1921 = vmatpush1.xpose.msra.mxu0 0.0
        %1922 = vmatprep.subr.mxu0 0.0
        %1923 = vmatpush1.xpose.msra.mxu0 0.0
        %1924 = vmatprep.subr.mxu0 0.0
        %1925 = vmatpush1.xpose.msra.mxu0 0.0
        %1926 = vmatprep.subr.mxu0 0.0
        %1927 = vmatpush1.xpose.msra.mxu0 0.0
        %1928 = vmatprep.subr.mxu0 0.0
        %1929 = vmatpush1.xpose.msra.mxu0 0.0
        %1930 = vmatprep.subr.mxu0 0.0
        %1931 = vmatpush1.xpose.msra.mxu0 0.0
        %1932 = vmatprep.mubr.f32.mxu0 0.0
        %1933 = vmatmul.mubr.f32.gmra.mrb[0].mxu0 %v1864
        %v1934 = vpop.f32.mrb[0].mxu0
        %v1935 = vadd.f32 0.0, %v1934
        %v1936 = vpop.f32.mrb[0].mxu0
        %1937 = vdwg.mxu0
        %v1938 = vsel %vm440, %v1935, -inf
        %1939 = vmax.xlane.f32.xlu0 %v1938
        %v1940 = vpop.xlane.xlu0 %1939
        %v1941 = vsub.f32 %v1935, %v1940
        %v1942 = vmul.f32 %v1941, 1.442695
        %v1943 = vpow.pop %v1942
        %v1944 = vsel %vm440, %v1943, 0.0
        %1945 = vadd.xlane.f32.xlu0 %v1944
        %v1946 = vpop.xlane.xlu0 %1945
        %v1947 = vrcp.pop %v1946
        %v1948 = vmul.f32 %v1943, %v1947
        %s1949 = scalar_lea.vmem %s279, 48 [#allocation11]
        %1950 = vst.msk [vmem:[%s1949] sm:$0xff] %vm440, %v1948
        %1951 = vrot.lane.b32.xlu0 %v1858, 40
        %v1952 = vpop.permute.xlu0 %1951
        %v1955 = vsel %vm440, %v1948, 0
        %1957 = vmatprep.subr.mxu0 0.0
        %1958 = vmatpush1.msra.mxu0 %v1952
        %1959 = vmatprep.subr.mxu0 0.0
        %1960 = vmatpush1.msra.mxu0 0.0
        %1961 = vmatprep.subr.mxu0 0.0
        %1962 = vmatpush1.msra.mxu0 0.0
        %1963 = vmatprep.subr.mxu0 0.0
        %1964 = vmatpush1.msra.mxu0 0.0
        %1965 = vmatprep.subr.mxu0 0.0
        %1966 = vmatpush1.msra.mxu0 0.0
        %1967 = vmatprep.subr.mxu0 0.0
        %1968 = vmatpush1.msra.mxu0 0.0
        %1969 = vmatprep.subr.mxu0 0.0
        %1970 = vmatpush1.msra.mxu0 0.0
        %1971 = vmatprep.subr.mxu0 0.0
        %1972 = vmatpush1.msra.mxu0 0.0
        %1973 = vmatprep.subr.mxu0 0.0
        %1974 = vmatpush1.msra.mxu0 0.0
        %1975 = vmatprep.subr.mxu0 0.0
        %1976 = vmatpush1.msra.mxu0 0.0
        %1977 = vmatprep.subr.mxu0 0.0
        %1978 = vmatpush1.msra.mxu0 0.0
        %1979 = vmatprep.subr.mxu0 0.0
        %1980 = vmatpush1.msra.mxu0 0.0
        %1981 = vmatprep.subr.mxu0 0.0
        %1982 = vmatpush1.msra.mxu0 0.0
        %1983 = vmatprep.subr.mxu0 0.0
        %1984 = vmatpush1.msra.mxu0 0.0
        %1985 = vmatprep.subr.mxu0 0.0
        %1986 = vmatpush1.msra.mxu0 0.0
        %1987 = vmatprep.subr.mxu0 0.0
        %1988 = vmatpush1.msra.mxu0 0.0
        %1989 = vmatprep.subr.mxu0 0.0
        %1990 = vmatpush1.msra.mxu0 0.0
        %1991 = vmatprep.subr.mxu0 0.0
        %1992 = vmatpush1.msra.mxu0 0.0
        %1993 = vmatprep.subr.mxu0 0.0
        %1994 = vmatpush1.msra.mxu0 0.0
        %1995 = vmatprep.subr.mxu0 0.0
        %1996 = vmatpush1.msra.mxu0 0.0
        %1997 = vmatprep.subr.mxu0 0.0
        %1998 = vmatpush1.msra.mxu0 0.0
        %1999 = vmatprep.subr.mxu0 0.0
        %2000 = vmatpush1.msra.mxu0 0.0
        %2001 = vmatprep.subr.mxu0 0.0
        %2002 = vmatpush1.msra.mxu0 0.0
        %2003 = vmatprep.subr.mxu0 0.0
        %2004 = vmatpush1.msra.mxu0 0.0
        %2005 = vmatprep.subr.mxu0 0.0
        %2006 = vmatpush1.msra.mxu0 0.0
        %2007 = vmatprep.subr.mxu0 0.0
        %2008 = vmatpush1.msra.mxu0 0.0
        %2009 = vmatprep.subr.mxu0 0.0
        %2010 = vmatpush1.msra.mxu0 0.0
        %2011 = vmatprep.subr.mxu0 0.0
        %2012 = vmatpush1.msra.mxu0 0.0
        %2013 = vmatprep.subr.mxu0 0.0
        %2014 = vmatpush1.msra.mxu0 0.0
        %2015 = vmatprep.subr.mxu0 0.0
        %2016 = vmatpush1.msra.mxu0 0.0
        %2017 = vmatprep.subr.mxu0 0.0
        %2018 = vmatpush1.msra.mxu0 0.0
        %2019 = vmatprep.subr.mxu0 0.0
        %2020 = vmatpush1.msra.mxu0 0.0
        %2021 = vmatprep.mubr.f32.mxu0 0.0
        %2022 = vmatmul.mubr.f32.gmra.mrb[0].mxu0 %v1955
        %v2023 = vpop.f32.mrb[0].mxu0
        %v2024 = vadd.f32 0.0, %v2023
        %v2025 = vpop.f32.mrb[0].mxu0
        %2026 = vdwg.mxu0
        %s2027 = scalar_lea.vmem [#allocation9], 24
        %v2028 = vld [vmem:[%s2027] sm:$0xf]
        %v2030 = vsel %vm365, %v2024, 0
        %v2033 = vsel %vm533, %v2028, 0
        %2035 = vmatprep.subr.mxu0 0.0
        %2036 = vmatpush1.msra.mxu0 %v2033
        %2037 = vmatprep.subr.mxu0 0.0
        %2038 = vmatpush1.msra.mxu0 0.0
        %2039 = vmatprep.subr.mxu0 0.0
        %2040 = vmatpush1.msra.mxu0 0.0
        %2041 = vmatprep.subr.mxu0 0.0
        %2042 = vmatpush1.msra.mxu0 0.0
        %2043 = vmatprep.subr.mxu0 0.0
        %2044 = vmatpush1.msra.mxu0 0.0
        %2045 = vmatprep.subr.mxu0 0.0
        %2046 = vmatpush1.msra.mxu0 0.0
        %2047 = vmatprep.subr.mxu0 0.0
        %2048 = vmatpush1.msra.mxu0 0.0
        %2049 = vmatprep.subr.mxu0 0.0
        %2050 = vmatpush1.msra.mxu0 0.0
        %2051 = vmatprep.subr.mxu0 0.0
        %2052 = vmatpush1.msra.mxu0 0.0
        %2053 = vmatprep.subr.mxu0 0.0
        %2054 = vmatpush1.msra.mxu0 0.0
        %2055 = vmatprep.subr.mxu0 0.0
        %2056 = vmatpush1.msra.mxu0 0.0
        %2057 = vmatprep.subr.mxu0 0.0
        %2058 = vmatpush1.msra.mxu0 0.0
        %2059 = vmatprep.subr.mxu0 0.0
        %2060 = vmatpush1.msra.mxu0 0.0
        %2061 = vmatprep.subr.mxu0 0.0
        %2062 = vmatpush1.msra.mxu0 0.0
        %2063 = vmatprep.subr.mxu0 0.0
        %2064 = vmatpush1.msra.mxu0 0.0
        %2065 = vmatprep.subr.mxu0 0.0
        %2066 = vmatpush1.msra.mxu0 0.0
        %2067 = vmatprep.subr.mxu0 0.0
        %2068 = vmatpush1.msra.mxu0 0.0
        %2069 = vmatprep.subr.mxu0 0.0
        %2070 = vmatpush1.msra.mxu0 0.0
        %2071 = vmatprep.subr.mxu0 0.0
        %2072 = vmatpush1.msra.mxu0 0.0
        %2073 = vmatprep.subr.mxu0 0.0
        %2074 = vmatpush1.msra.mxu0 0.0
        %2075 = vmatprep.subr.mxu0 0.0
        %2076 = vmatpush1.msra.mxu0 0.0
        %2077 = vmatprep.subr.mxu0 0.0
        %2078 = vmatpush1.msra.mxu0 0.0
        %2079 = vmatprep.subr.mxu0 0.0
        %2080 = vmatpush1.msra.mxu0 0.0
        %2081 = vmatprep.subr.mxu0 0.0
        %2082 = vmatpush1.msra.mxu0 0.0
        %2083 = vmatprep.subr.mxu0 0.0
        %2084 = vmatpush1.msra.mxu0 0.0
        %2085 = vmatprep.subr.mxu0 0.0
        %2086 = vmatpush1.msra.mxu0 0.0
        %2087 = vmatprep.subr.mxu0 0.0
        %2088 = vmatpush1.msra.mxu0 0.0
        %2089 = vmatprep.subr.mxu0 0.0
        %2090 = vmatpush1.msra.mxu0 0.0
        %2091 = vmatprep.subr.mxu0 0.0
        %2092 = vmatpush1.msra.mxu0 0.0
        %2093 = vmatprep.subr.mxu0 0.0
        %2094 = vmatpush1.msra.mxu0 0.0
        %2095 = vmatprep.subr.mxu0 0.0
        %2096 = vmatpush1.msra.mxu0 0.0
        %2097 = vmatprep.subr.mxu0 0.0
        %2098 = vmatpush1.msra.mxu0 0.0
        %2099 = vmatprep.mubr.f32.mxu0 0.0
        %2100 = vmatmul.mubr.f32.gmra.mrb[0].mxu0 %v2030
        %v2101 = vpop.f32.mrb[0].mxu0
        %v2102 = vadd.f32 0.0, %v2101
        %v2103 = vpop.f32.mrb[0].mxu0
        %2104 = vdwg.mxu0
        %v2105 = vld [vmem:[#allocation3] sm:$0xff]
        %v2106 = vadd.f32 %v2105, %v2102
        %2107 = vst.msk [vmem:[#allocation3] sm:$0xff] %vm285, %v2106
        %v2108 = vld [vmem:[#allocation2] sm:$0xff]
        %2110 = vrot.lane.b32.xlu0 %v2108, 100
        %v2111 = vpop.permute.xlu0 %2110
        %2112 = vrot.lane.b32.xlu0 %v2108, 68
        %v2113 = vpop.permute.xlu0 %2112
        %v2114 = vsel %vm365, %v2111, 0
        %v2116 = vsel %vm365, %v2113, 0
        %2118 = vmatprep.subr.mxu0 0.0
        %2119 = vmatpush1.xpose.msra.mxu0 %v2116
        %2120 = vmatprep.subr.mxu0 0.0
        %2121 = vmatpush1.xpose.msra.mxu0 0.0
        %2122 = vmatprep.subr.mxu0 0.0
        %2123 = vmatpush1.xpose.msra.mxu0 0.0
        %2124 = vmatprep.subr.mxu0 0.0
        %2125 = vmatpush1.xpose.msra.mxu0 0.0
        %2126 = vmatprep.subr.mxu0 0.0
        %2127 = vmatpush1.xpose.msra.mxu0 0.0
        %2128 = vmatprep.subr.mxu0 0.0
        %2129 = vmatpush1.xpose.msra.mxu0 0.0
        %2130 = vmatprep.subr.mxu0 0.0
        %2131 = vmatpush1.xpose.msra.mxu0 0.0
        %2132 = vmatprep.subr.mxu0 0.0
        %2133 = vmatpush1.xpose.msra.mxu0 0.0
        %2134 = vmatprep.subr.mxu0 0.0
        %2135 = vmatpush1.xpose.msra.mxu0 0.0
        %2136 = vmatprep.subr.mxu0 0.0
        %2137 = vmatpush1.xpose.msra.mxu0 0.0
        %2138 = vmatprep.subr.mxu0 0.0
        %2139 = vmatpush1.xpose.msra.mxu0 0.0
        %2140 = vmatprep.subr.mxu0 0.0
        %2141 = vmatpush1.xpose.msra.mxu0 0.0
        %2142 = vmatprep.subr.mxu0 0.0
        %2143 = vmatpush1.xpose.msra.mxu0 0.0
        %2144 = vmatprep.subr.mxu0 0.0
        %2145 = vmatpush1.xpose.msra.mxu0 0.0
        %2146 = vmatprep.subr.mxu0 0.0
        %2147 = vmatpush1.xpose.msra.mxu0 0.0
        %2148 = vmatprep.subr.mxu0 0.0
        %2149 = vmatpush1.xpose.msra.mxu0 0.0
        %2150 = vmatprep.subr.mxu0 0.0
        %2151 = vmatpush1.xpose.msra.mxu0 0.0
        %2152 = vmatprep.subr.mxu0 0.0
        %2153 = vmatpush1.xpose.msra.mxu0 0.0
        %2154 = vmatprep.subr.mxu0 0.0
        %2155 = vmatpush1.xpose.msra.mxu0 0.0
        %2156 = vmatprep.subr.mxu0 0.0
        %2157 = vmatpush1.xpose.msra.mxu0 0.0
        %2158 = vmatprep.subr.mxu0 0.0
        %2159 = vmatpush1.xpose.msra.mxu0 0.0
        %2160 = vmatprep.subr.mxu0 0.0
        %2161 = vmatpush1.xpose.msra.mxu0 0.0
        %2162 = vmatprep.subr.mxu0 0.0
        %2163 = vmatpush1.xpose.msra.mxu0 0.0
        %2164 = vmatprep.subr.mxu0 0.0
        %2165 = vmatpush1.xpose.msra.mxu0 0.0
        %2166 = vmatprep.subr.mxu0 0.0
        %2167 = vmatpush1.xpose.msra.mxu0 0.0
        %2168 = vmatprep.subr.mxu0 0.0
        %2169 = vmatpush1.xpose.msra.mxu0 0.0
        %2170 = vmatprep.subr.mxu0 0.0
        %2171 = vmatpush1.xpose.msra.mxu0 0.0
        %2172 = vmatprep.subr.mxu0 0.0
        %2173 = vmatpush1.xpose.msra.mxu0 0.0
        %2174 = vmatprep.subr.mxu0 0.0
        %2175 = vmatpush1.xpose.msra.mxu0 0.0
        %2176 = vmatprep.subr.mxu0 0.0
        %2177 = vmatpush1.xpose.msra.mxu0 0.0
        %2178 = vmatprep.subr.mxu0 0.0
        %2179 = vmatpush1.xpose.msra.mxu0 0.0
        %2180 = vmatprep.subr.mxu0 0.0
        %2181 = vmatpush1.xpose.msra.mxu0 0.0
        %2182 = vmatprep.mubr.f32.mxu0 0.0
        %2183 = vmatmul.mubr.f32.gmra.mrb[0].mxu0 %v2114
        %v2184 = vpop.f32.mrb[0].mxu0
        %v2185 = vadd.f32 0.0, %v2184
        %v2186 = vpop.f32.mrb[0].mxu0
        %2187 = vdwg.mxu0
        %v2188 = vsel %vm440, %v2185, -inf
        %2189 = vmax.xlane.f32.xlu0 %v2188
        %v2190 = vpop.xlane.xlu0 %2189
        %v2191 = vsub.f32 %v2185, %v2190
        %v2192 = vmul.f32 %v2191, 1.442695
        %v2193 = vpow.pop %v2192
        %v2194 = vsel %vm440, %v2193, 0.0
        %2195 = vadd.xlane.f32.xlu0 %v2194
        %v2196 = vpop.xlane.xlu0 %2195
        %v2197 = vrcp.pop %v2196
        %v2198 = vmul.f32 %v2193, %v2197
        %s2199 = scalar_lea.vmem %s279, 56 [#allocation11]
        %2200 = vst.msk [vmem:[%s2199] sm:$0xff] %vm440, %v2198
        %2201 = vrot.lane.b32.xlu0 %v2108, 36
        %v2202 = vpop.permute.xlu0 %2201
        %v2205 = vsel %vm440, %v2198, 0
        %2207 = vmatprep.subr.mxu0 0.0
        %2208 = vmatpush1.msra.mxu0 %v2202
        %2209 = vmatprep.subr.mxu0 0.0
        %2210 = vmatpush1.msra.mxu0 0.0
        %2211 = vmatprep.subr.mxu0 0.0
        %2212 = vmatpush1.msra.mxu0 0.0
        %2213 = vmatprep.subr.mxu0 0.0
        %2214 = vmatpush1.msra.mxu0 0.0
        %2215 = vmatprep.subr.mxu0 0.0
        %2216 = vmatpush1.msra.mxu0 0.0
        %2217 = vmatprep.subr.mxu0 0.0
        %2218 = vmatpush1.msra.mxu0 0.0
        %2219 = vmatprep.subr.mxu0 0.0
        %2220 = vmatpush1.msra.mxu0 0.0
        %2221 = vmatprep.subr.mxu0 0.0
        %2222 = vmatpush1.msra.mxu0 0.0
        %2223 = vmatprep.subr.mxu0 0.0
        %2224 = vmatpush1.msra.mxu0 0.0
        %2225 = vmatprep.subr.mxu0 0.0
        %2226 = vmatpush1.msra.mxu0 0.0
        %2227 = vmatprep.subr.mxu0 0.0
        %2228 = vmatpush1.msra.mxu0 0.0
        %2229 = vmatprep.subr.mxu0 0.0
        %2230 = vmatpush1.msra.mxu0 0.0
        %2231 = vmatprep.subr.mxu0 0.0
        %2232 = vmatpush1.msra.mxu0 0.0
        %2233 = vmatprep.subr.mxu0 0.0
        %2234 = vmatpush1.msra.mxu0 0.0
        %2235 = vmatprep.subr.mxu0 0.0
        %2236 = vmatpush1.msra.mxu0 0.0
        %2237 = vmatprep.subr.mxu0 0.0
        %2238 = vmatpush1.msra.mxu0 0.0
        %2239 = vmatprep.subr.mxu0 0.0
        %2240 = vmatpush1.msra.mxu0 0.0
        %2241 = vmatprep.subr.mxu0 0.0
        %2242 = vmatpush1.msra.mxu0 0.0
        %2243 = vmatprep.subr.mxu0 0.0
        %2244 = vmatpush1.msra.mxu0 0.0
        %2245 = vmatprep.subr.mxu0 0.0
        %2246 = vmatpush1.msra.mxu0 0.0
        %2247 = vmatprep.subr.mxu0 0.0
        %2248 = vmatpush1.msra.mxu0 0.0
        %2249 = vmatprep.subr.mxu0 0.0
        %2250 = vmatpush1.msra.mxu0 0.0
        %2251 = vmatprep.subr.mxu0 0.0
        %2252 = vmatpush1.msra.mxu0 0.0
        %2253 = vmatprep.subr.mxu0 0.0
        %2254 = vmatpush1.msra.mxu0 0.0
        %2255 = vmatprep.subr.mxu0 0.0
        %2256 = vmatpush1.msra.mxu0 0.0
        %2257 = vmatprep.subr.mxu0 0.0
        %2258 = vmatpush1.msra.mxu0 0.0
        %2259 = vmatprep.subr.mxu0 0.0
        %2260 = vmatpush1.msra.mxu0 0.0
        %2261 = vmatprep.subr.mxu0 0.0
        %2262 = vmatpush1.msra.mxu0 0.0
        %2263 = vmatprep.subr.mxu0 0.0
        %2264 = vmatpush1.msra.mxu0 0.0
        %2265 = vmatprep.subr.mxu0 0.0
        %2266 = vmatpush1.msra.mxu0 0.0
        %2267 = vmatprep.subr.mxu0 0.0
        %2268 = vmatpush1.msra.mxu0 0.0
        %2269 = vmatprep.subr.mxu0 0.0
        %2270 = vmatpush1.msra.mxu0 0.0
        %2271 = vmatprep.mubr.f32.mxu0 0.0
        %2272 = vmatmul.mubr.f32.gmra.mrb[0].mxu0 %v2205
        %v2273 = vpop.f32.mrb[0].mxu0
        %v2274 = vadd.f32 0.0, %v2273
        %v2275 = vpop.f32.mrb[0].mxu0
        %2276 = vdwg.mxu0
        %s2277 = scalar_lea.vmem [#allocation9], 28
        %v2278 = vld [vmem:[%s2277] sm:$0xf]
        %v2280 = vsel %vm365, %v2274, 0
        %v2283 = vsel %vm533, %v2278, 0
        %2285 = vmatprep.subr.mxu0 0.0
        %2286 = vmatpush1.msra.mxu0 %v2283
        %2287 = vmatprep.subr.mxu0 0.0
        %2288 = vmatpush1.msra.mxu0 0.0
        %2289 = vmatprep.subr.mxu0 0.0
        %2290 = vmatpush1.msra.mxu0 0.0
        %2291 = vmatprep.subr.mxu0 0.0
        %2292 = vmatpush1.msra.mxu0 0.0
        %2293 = vmatprep.subr.mxu0 0.0
        %2294 = vmatpush1.msra.mxu0 0.0
        %2295 = vmatprep.subr.mxu0 0.0
        %2296 = vmatpush1.msra.mxu0 0.0
        %2297 = vmatprep.subr.mxu0 0.0
        %2298 = vmatpush1.msra.mxu0 0.0
        %2299 = vmatprep.subr.mxu0 0.0
        %2300 = vmatpush1.msra.mxu0 0.0
        %2301 = vmatprep.subr.mxu0 0.0
        %2302 = vmatpush1.msra.mxu0 0.0
        %2303 = vmatprep.subr.mxu0 0.0
        %2304 = vmatpush1.msra.mxu0 0.0
        %2305 = vmatprep.subr.mxu0 0.0
        %2306 = vmatpush1.msra.mxu0 0.0
        %2307 = vmatprep.subr.mxu0 0.0
        %2308 = vmatpush1.msra.mxu0 0.0
        %2309 = vmatprep.subr.mxu0 0.0
        %2310 = vmatpush1.msra.mxu0 0.0
        %2311 = vmatprep.subr.mxu0 0.0
        %2312 = vmatpush1.msra.mxu0 0.0
        %2313 = vmatprep.subr.mxu0 0.0
        %2314 = vmatpush1.msra.mxu0 0.0
        %2315 = vmatprep.subr.mxu0 0.0
        %2316 = vmatpush1.msra.mxu0 0.0
        %2317 = vmatprep.subr.mxu0 0.0
        %2318 = vmatpush1.msra.mxu0 0.0
        %2319 = vmatprep.subr.mxu0 0.0
        %2320 = vmatpush1.msra.mxu0 0.0
        %2321 = vmatprep.subr.mxu0 0.0
        %2322 = vmatpush1.msra.mxu0 0.0
        %2323 = vmatprep.subr.mxu0 0.0
        %2324 = vmatpush1.msra.mxu0 0.0
        %2325 = vmatprep.subr.mxu0 0.0
        %2326 = vmatpush1.msra.mxu0 0.0
        %2327 = vmatprep.subr.mxu0 0.0
        %2328 = vmatpush1.msra.mxu0 0.0
        %2329 = vmatprep.subr.mxu0 0.0
        %2330 = vmatpush1.msra.mxu0 0.0
        %2331 = vmatprep.subr.mxu0 0.0
        %2332 = vmatpush1.msra.mxu0 0.0
        %2333 = vmatprep.subr.mxu0 0.0
        %2334 = vmatpush1.msra.mxu0 0.0
        %2335 = vmatprep.subr.mxu0 0.0
        %2336 = vmatpush1.msra.mxu0 0.0
        %2337 = vmatprep.subr.mxu0 0.0
        %2338 = vmatpush1.msra.mxu0 0.0
        %2339 = vmatprep.subr.mxu0 0.0
        %2340 = vmatpush1.msra.mxu0 0.0
        %2341 = vmatprep.subr.mxu0 0.0
        %2342 = vmatpush1.msra.mxu0 0.0
        %2343 = vmatprep.subr.mxu0 0.0
        %2344 = vmatpush1.msra.mxu0 0.0
        %2345 = vmatprep.subr.mxu0 0.0
        %2346 = vmatpush1.msra.mxu0 0.0
        %2347 = vmatprep.subr.mxu0 0.0
        %2348 = vmatpush1.msra.mxu0 0.0
        %2349 = vmatprep.mubr.f32.mxu0 0.0
        %2350 = vmatmul.mubr.f32.gmra.mrb[0].mxu0 %v2280
        %v2351 = vpop.f32.mrb[0].mxu0
        %v2352 = vadd.f32 0.0, %v2351
        %v2353 = vpop.f32.mrb[0].mxu0
        %2354 = vdwg.mxu0
        %v2355 = vld [vmem:[#allocation3] sm:$0xff]
        %v2356 = vadd.f32 %v2355, %v2352
        %2357 = vst.msk [vmem:[#allocation3] sm:$0xff] %vm285, %v2356
        %v2358 = vld [vmem:[#allocation3] sm:$0xff]
        %v2359 = vld [vmem:[%s3] sm:$0x1]
        %v2361 = vlaneseq
        %v2362 = vshrl.u32 %v2361, 7
        %v2363 = vsub.s32 0, %v2362
        %v2364 = vrot.slane %v2359, %v2363
        %v2366 = vadd.f32 %v2358, %v2364
        %2367 = vst.msk [vmem:[%s272] sm:$0xff] %vm285, %v2366
        %s2368 = sand.u32 %s124, 1
        %s2369 = scalar_lea.sflag [#allocation6], %s2368
        %s2370 = sand.u32 %s124, 1
        %s2371 = smul.addr %s2370, 8
        %s2372 = scalar_lea.vmem [#allocation10], %s2371
        %s2373 = sand.u32 %s150, 1
        %s2374 = scalar_lea.sflag [#allocation12], %s2373
        %s2375 = sand.u32 %s150, 1
        %s2376 = smul.addr %s2375, 64
        %s2377 = scalar_lea.vmem [#allocation11], %s2376
        // Predicated region
        $region49: #{tpu_custom_call.1} parent=35 // pred_check
          %p2378 = pneg %p134
        $region50: #{tpu_custom_call.1} parent=35 // pred_check_branch
          %2380 = sbr.rel (%p2378) target = $region52
        $region51: #{tpu_custom_call.1} parent=35 // pred_region
          %s2382 = ssub.s32 128, 128
          %2383 = vsyncadd %s2369, %s2382
          %s2384 = smul.addr %s27, 128
          %s2385 = scalar_lea.hbm %s4, %s2384
          %s2387 = sshll.u32 %s2372, 4
          %s2388 = int_to_ptr.vmem [resolvable:$true] %s2387
          %2390 = dma.vmem_to_hbm [thread:$0]  %s2388, 128, %s2385, %s2369
        $region52: #{tpu_custom_call.1} parent=35 // pred_fallthru
          _
        // Predicated region
        $region53: #{tpu_custom_call.1} parent=35 // pred_check
          %p2391 = pneg %p160
        $region54: #{tpu_custom_call.1} parent=35 // pred_check_branch
          %2393 = sbr.rel (%p2391) target = $region56
        $region55: #{tpu_custom_call.1} parent=35 // pred_region
          %s2395 = ssub.s32 1024, 1024
          %2396 = vsyncadd %s2374, %s2395
          %s2397 = smul.addr %s27, 8
          %s2398 = smul.addr %s2397, 128
          %s2399 = scalar_lea.hbm %s5, %s2398
          %s2400 = sshll.u32 %s2377, 4
          %s2401 = int_to_ptr.vmem [resolvable:$true] %s2400
          %2406 = dma.vmem_to_hbm [thread:$0]  %s2401, 1024, %s2399, %s2374, 128, 128, 8
        $region56: #{tpu_custom_call.1} parent=35 // pred_fallthru
          _
      $region36: #{tpu_custom_call.1} parent=5 // pred_fallthru
        _
      %p2407 = scmp.le.s32.totalorder 2, %s22
      // Predicated region
      $region57: #{tpu_custom_call.1} parent=5 // pred_check
        %p2408 = pneg %p2407
      $region58: #{tpu_custom_call.1} parent=5 // pred_check_branch
        %2410 = sbr.rel (%p2408) target = $region60
      $region59: #{tpu_custom_call.1} parent=5 // pred_region
        %s2411 = ssub.s32 %s22, 2
        // Predicated region
        $region61: #{tpu_custom_call.1} parent=59 // pred_check
          %p2412 = pneg %p140
        $region62: #{tpu_custom_call.1} parent=59 // pred_check_branch
          %2414 = sbr.rel (%p2412) target = $region64
        $region63: #{tpu_custom_call.1} parent=59 // pred_region
          %s2415 = sand.u32 %s125, 1
          %s2416 = scalar_lea.sflag [#allocation6], %s2415
          %s2417 = sand.u32 %s125, 1
          %s2418 = smul.addr %s2417, 8
          %s2419 = scalar_lea.vmem [#allocation10], %s2418
          %2420 = dma.done %s2416, 128
        $region64: #{tpu_custom_call.1} parent=59 // pred_fallthru
          _
        // Predicated region
        $region65: #{tpu_custom_call.1} parent=59 // pred_check
          %p2421 = pneg %p166
        $region66: #{tpu_custom_call.1} parent=59 // pred_check_branch
          %2423 = sbr.rel (%p2421) target = $region68
        $region67: #{tpu_custom_call.1} parent=59 // pred_region
          %s2424 = sand.u32 %s151, 1
          %s2425 = scalar_lea.sflag [#allocation12], %s2424
          %s2426 = sand.u32 %s151, 1
          %s2427 = smul.addr %s2426, 64
          %s2428 = scalar_lea.vmem [#allocation11], %s2427
          %2429 = dma.done %s2425, 1024
        $region68: #{tpu_custom_call.1} parent=59 // pred_fallthru
          _
      $region60: #{tpu_custom_call.1} parent=5 // pred_fallthru
        _
    $region6: #{tpu_custom_call.1} parent=1 // loop_footer
      %s26 = sadd.s32 1, %s22
    $region7: #{tpu_custom_call.1} parent=1 // loop_footer_branch
      %21 = sbr.rel target = $region3
    $region8: #{tpu_custom_call.1} parent=1 // loop_exit
      _
    %2430 = vsyncpa [#allocation5], 1
    %s2431 = scalar_lea.sflag [#allocation5], 1
    %2432 = vsyncpa %s2431, 1
    %2433 = vsyncpa [#allocation8], 1
    %2434 = vsyncpa [#allocation6], 1
    %s2435 = scalar_lea.sflag [#allocation6], 1
    %2436 = vsyncpa %s2435, 1
    %2437 = vsyncpa [#allocation12], 1
    %s2438 = scalar_lea.sflag [#allocation12], 1
    %2439 = vsyncpa %s2438, 1

</llo_original>
